<compile_context>
chip_gen: v7x
topology: tpu7x:2x2x1
jax: 0.10.0
libtpu: 0.0.40
codegen_flags: <defaults>
</compile_context>

<pallas_src>
import jax
import jax.numpy as jnp
from jax.experimental import pallas as pl
from jax.experimental.pallas import tpu as pltpu


_TRUE_H1, _TRUE_H2, _TRUE_H3 = 960, 480, 240
_H1, _H2, _H3 = 1024, 512, 256          # lane-padded hidden dims


def _round_up(x, m):
    return (x + m - 1) // m * m


def _fused_mlp_kernel(x_ref, w1_ref, b1_ref, w2_ref, b2_ref, w3_ref, b3_ref,
                      wc_ref, bc_ref, emb_ref, logits_ref):
    """One batch tile: 3x (Linear + ReLU + eval-dropout) + classifier, fused.

    bf16 operands on the MXU, f32 accumulation; bias+ReLU in f32 with an
    immediate bf16 cast so the f32 intermediates die early (spill relief).
    """
    x = x_ref[...]                                            # bf16 (TB, Kp)

    a1 = jnp.dot(x, w1_ref[...], preferred_element_type=jnp.float32)
    h1 = jnp.maximum(a1 + b1_ref[...], 0.0).astype(jnp.bfloat16)

    a2 = jnp.dot(h1, w2_ref[...], preferred_element_type=jnp.float32)
    h2 = jnp.maximum(a2 + b2_ref[...], 0.0).astype(jnp.bfloat16)

    a3 = jnp.dot(h2, w3_ref[...], preferred_element_type=jnp.float32)
    h3 = jnp.maximum(a3 + b3_ref[...], 0.0).astype(jnp.bfloat16)

    emb_ref[...] = h3.astype(emb_ref.dtype)                   # bf16 writeback

    logits = jnp.dot(h3, wc_ref[...],
                     preferred_element_type=jnp.float32) + bc_ref[...]
    logits_ref[...] = logits.astype(logits_ref.dtype)
    # TODO(synk): training-mode dropout (p=0.5) would use pltpu.prng_seed +
    # pltpu.stateful_bernoulli here; eval-mode identity matches module.eval().


def init_params(key, input_dim, output_dim):
    """PyTorch nn.Linear-style init (U(+/-1/sqrt(fan_in))), stored transposed
    (W^T: [in, out]), zero-padded to 128-lane multiples on BOTH dims,
    weights cast to bf16, biases kept in f32.
    """
    assert output_dim >= 1
    k_pad = max(128, _round_up(input_dim, 128))
    logit_pad = max(128, _round_up(output_dim, 128))
    true_dims = [(input_dim, _TRUE_H1), (_TRUE_H1, _TRUE_H2),
                 (_TRUE_H2, _TRUE_H3), (_TRUE_H3, output_dim)]
    padded_dims = [(k_pad, _H1), (_H1, _H2), (_H2, _H3), (_H3, logit_pad)]
    params = []
    for (fan_in, fan_out), (pin, pout) in zip(true_dims, padded_dims):
        key, kw, kb = jax.random.split(key, 3)
        bound = 1.0 / float(fan_in) ** 0.5
        w_t = jax.random.uniform(kw, (fan_in, fan_out), jnp.float32, -bound, bound)
        b = jax.random.uniform(kb, (1, fan_out), jnp.float32, -bound, bound)
        w_pad = jnp.zeros((pin, pout), jnp.float32).at[:fan_in, :fan_out].set(w_t)
        b_pad = jnp.zeros((1, pout), jnp.float32).at[:, :fan_out].set(b)
        params.append((w_pad.astype(jnp.bfloat16), b_pad))
    return params


def _select_batch_tile(B, batch_tile):
    """Pick (TB, Bp): TB multiple of 8, capped at batch_tile, and chosen so the
    grid has >= 2 steps whenever the padded batch allows (v7x 2-TC sharding)."""
    tb_cap = max(8, _round_up(int(batch_tile), 8))
    b8 = _round_up(B, 8)
    tb = min(tb_cap, _round_up((b8 + 1) // 2, 8))
    bp = _round_up(b8, tb)
    return tb, bp


def vhpredictor_label_model_forward(x, params, *, output_dim, batch_tile=1024,
                                    vmem_limit_bytes=32 * 1024 * 1024,
                                    return_padded=False):
    """Forward pass matching the PyTorch module in eval mode.

    Returns (logits [B, output_dim] f32, embeddings [B, 240] bf16).
    With return_padded=True the lane/batch-padded kernel outputs are returned
    directly (no post-kernel HBM slice copies).
    """
    (w1, b1), (w2, b2), (w3, b3), (wc, bc) = params
    B, K = x.shape
    Kp, H1 = w1.shape
    H2, H3, NP = w2.shape[1], w3.shape[1], wc.shape[1]
    assert K <= Kp, "input_dim larger than the padded weights"

    TB, Bp = _select_batch_tile(B, batch_tile)
    grid = (Bp // TB,)

    # bf16 input, zero-padded to (Bp, Kp): halves input DMA, lane-dense loads,
    # padded rows/cols hit zero weight rows so results are unchanged.
    x_p = jnp.pad(x.astype(jnp.bfloat16), ((0, Bp - B), (0, Kp - K)))

    row = lambda i: (i, 0)
    const = lambda i: (0, 0)

    flops = 2 * Bp * (Kp * H1 + H1 * H2 + H2 * H3 + H3 * NP)
    bytes_accessed = (Bp * Kp * 2
                      + sum(int(w.size) * 2 + int(b.size) * 4 for (w, b) in params)
                      + Bp * H3 * 2 + Bp * NP * 4)

    emb_p, logits_p = pl.pallas_call(
        _fused_mlp_kernel,
        out_shape=(jax.ShapeDtypeStruct((Bp, H3), jnp.bfloat16),
                   jax.ShapeDtypeStruct((Bp, NP), jnp.float32)),
        grid=grid,
        in_specs=[
            pl.BlockSpec((TB, Kp), row),
            pl.BlockSpec(w1.shape, const), pl.BlockSpec(b1.shape, const),
            pl.BlockSpec(w2.shape, const), pl.BlockSpec(b2.shape, const),
            pl.BlockSpec(w3.shape, const), pl.BlockSpec(b3.shape, const),
            pl.BlockSpec(wc.shape, const), pl.BlockSpec(bc.shape, const),
        ],
        out_specs=(pl.BlockSpec((TB, H3), row),
                   pl.BlockSpec((TB, NP), row)),
        compiler_params=pltpu.CompilerParams(
            dimension_semantics=("parallel",),
            vmem_limit_bytes=vmem_limit_bytes),
        cost_estimate=pl.CostEstimate(
            flops=flops, transcendentals=0, bytes_accessed=bytes_accessed),
    )(x_p, w1, b1, w2, b2, w3, b3, wc, bc)

    if return_padded:
        return logits_p, emb_p
    logits = logits_p[:B, :output_dim]
    embeddings = emb_p[:B, :_TRUE_H3]
    return logits, embeddings


def _ref_forward(x, params, output_dim):
    """Pure-JAX mirror of the kernel math (bf16 operands, f32 accumulation,
    bf16 inter-layer activations)."""
    (w1, b1), (w2, b2), (w3, b3), (wc, bc) = params
    Kp = w1.shape[0]
    h = jnp.pad(x.astype(jnp.bfloat16), ((0, 0), (0, Kp - x.shape[1])))

    def layer(h, w, b):
        a = jnp.dot(h, w, preferred_element_type=jnp.float32) + b
        return jnp.maximum(a, 0.0).astype(jnp.bfloat16)

    h = layer(h, w1, b1)
    h = layer(h, w2, b2)
    h = layer(h, w3, b3)
    logits = jnp.dot(h, wc, preferred_element_type=jnp.float32) + bc
    return logits[:, :output_dim], h[:, :_TRUE_H3]


if __name__ == "__main__":
    key = jax.random.PRNGKey(0)
    batch, input_dim, output_dim = 8, 32, 16

    key, kx = jax.random.split(key)
    x = jax.random.normal(kx, (batch, input_dim), dtype=jnp.float32)

    params = init_params(key, input_dim, output_dim)

    logits, embeddings = vhpredictor_label_model_forward(
        x, params, output_dim=output_dim)
    jax.block_until_ready((logits, embeddings))

    assert logits.shape == (batch, output_dim)
    assert embeddings.shape == (batch, _TRUE_H3)

    ref_logits, ref_emb = _ref_forward(x, params, output_dim)
    assert jnp.allclose(logits, ref_logits, atol=2e-2, rtol=2e-2)
    assert jnp.allclose(embeddings.astype(jnp.float32),
                        ref_emb.astype(jnp.float32), atol=2e-2, rtol=2e-2)

    # Exercise the batch-padding + multi-step grid path (40 rows -> TB=24,
    # Bp=48, grid=(2,) so both v7x TensorCores would be used).
    x2 = jax.random.normal(jax.random.PRNGKey(1), (40, input_dim), jnp.float32)
    logits2, emb2 = vhpredictor_label_model_forward(
        x2, params, output_dim=output_dim)
    jax.block_until_ready((logits2, emb2))
    ref_logits2, ref_emb2 = _ref_forward(x2, params, output_dim)
    assert logits2.shape == (40, output_dim) and emb2.shape == (40, _TRUE_H3)
    assert jnp.allclose(logits2, ref_logits2, atol=2e-2, rtol=2e-2)
    assert jnp.allclose(emb2.astype(jnp.float32),
                        ref_emb2.astype(jnp.float32), atol=2e-2, rtol=2e-2)

    # Exercise an explicit small tile override (grid length > 2).
    logits3, emb3 = vhpredictor_label_model_forward(
        x2, params, output_dim=output_dim, batch_tile=16)
    jax.block_until_ready((logits3, emb3))
    assert jnp.allclose(logits3, ref_logits2, atol=2e-2, rtol=2e-2)
    assert jnp.allclose(emb3.astype(jnp.float32),
                        ref_emb2.astype(jnp.float32), atol=2e-2, rtol=2e-2)

    print("KERNEL_OK")
</pallas_src>

<mosaic_0001>
module attributes {stable_mosaic.version = 11 : i64} {
  func.func @_fused_mlp_kernel(%arg0: i32, %arg1: memref<8x128xbf16, #tpu.memory_space<vmem>>, %arg2: memref<128x1024xbf16, #tpu.memory_space<vmem>>, %arg3: memref<1x1024xf32, #tpu.memory_space<vmem>>, %arg4: memref<1024x512xbf16, #tpu.memory_space<vmem>>, %arg5: memref<1x512xf32, #tpu.memory_space<vmem>>, %arg6: memref<512x256xbf16, #tpu.memory_space<vmem>>, %arg7: memref<1x256xf32, #tpu.memory_space<vmem>>, %arg8: memref<256x128xbf16, #tpu.memory_space<vmem>>, %arg9: memref<1x128xf32, #tpu.memory_space<vmem>>, %arg10: memref<8x256xbf16, #tpu.memory_space<vmem>>, %arg11: memref<8x128xf32, #tpu.memory_space<vmem>>) attributes {dimension_semantics = [#tpu.dimension_semantics<parallel>], iteration_bounds = array<i64: 1>, scalar_prefetch = 0 : i64, scratch_operands = 0 : i64, tpu.core_type = #tpu.core_type<tc>, window_params = [{transform_indices = @transform_0, window_bounds = array<i64: 8, 128>}, {pipeline_mode = #tpu.pipeline_mode<synchronous>, transform_indices = @transform_1, window_bounds = array<i64: 128, 1024>}, {pipeline_mode = #tpu.pipeline_mode<synchronous>, transform_indices = @transform_2, window_bounds = array<i64: 1, 1024>}, {pipeline_mode = #tpu.pipeline_mode<synchronous>, transform_indices = @transform_3, window_bounds = array<i64: 1024, 512>}, {pipeline_mode = #tpu.pipeline_mode<synchronous>, transform_indices = @transform_4, window_bounds = array<i64: 1, 512>}, {pipeline_mode = #tpu.pipeline_mode<synchronous>, transform_indices = @transform_5, window_bounds = array<i64: 512, 256>}, {pipeline_mode = #tpu.pipeline_mode<synchronous>, transform_indices = @transform_6, window_bounds = array<i64: 1, 256>}, {pipeline_mode = #tpu.pipeline_mode<synchronous>, transform_indices = @transform_7, window_bounds = array<i64: 256, 128>}, {pipeline_mode = #tpu.pipeline_mode<synchronous>, transform_indices = @transform_8, window_bounds = array<i64: 1, 128>}, {transform_indices = @transform_9, window_bounds = array<i64: 8, 256>}, {transform_indices = @transform_10, window_bounds = array<i64: 8, 128>}]} {
    %c0 = arith.constant 0 : index
    %c0_0 = arith.constant 0 : index
    %0 = vector.load %arg1[%c0, %c0_0] : memref<8x128xbf16, #tpu.memory_space<vmem>>, vector<8x128xbf16>
    %c0_1 = arith.constant 0 : index
    %c0_2 = arith.constant 0 : index
    %1 = vector.load %arg2[%c0_1, %c0_2] : memref<128x1024xbf16, #tpu.memory_space<vmem>>, vector<128x1024xbf16>
    %cst = arith.constant dense<0.000000e+00> : vector<8x1024xf32>
    %2 = tpu.matmul %0, %1, %cst {dimension_numbers = #tpu.dot_dimension_numbers<[1], [0], [0], [1], [0, 0, 1, 1], [], []>} : vector<8x128xbf16>, vector<128x1024xbf16>, vector<8x1024xf32> -> vector<8x1024xf32>
    %c0_3 = arith.constant 0 : index
    %c0_4 = arith.constant 0 : index
    %3 = vector.load %arg3[%c0_3, %c0_4] : memref<1x1024xf32, #tpu.memory_space<vmem>>, vector<1x1024xf32>
    %4 = vector.broadcast %3 : vector<1x1024xf32> to vector<8x1024xf32>
    %5 = arith.addf %2, %4 : vector<8x1024xf32>
    %cst_5 = arith.constant 0.000000e+00 : f32
    %6 = vector.broadcast %cst_5 : f32 to vector<8x1024xf32>
    %7 = arith.maximumf %5, %6 : vector<8x1024xf32>
    %8 = arith.truncf %7 : vector<8x1024xf32> to vector<8x1024xbf16>
    %c0_6 = arith.constant 0 : index
    %c0_7 = arith.constant 0 : index
    %9 = vector.load %arg4[%c0_6, %c0_7] : memref<1024x512xbf16, #tpu.memory_space<vmem>>, vector<1024x512xbf16>
    %cst_8 = arith.constant dense<0.000000e+00> : vector<8x512xf32>
    %10 = tpu.matmul %8, %9, %cst_8 {dimension_numbers = #tpu.dot_dimension_numbers<[1], [0], [0], [1], [0, 0, 1, 1], [], []>} : vector<8x1024xbf16>, vector<1024x512xbf16>, vector<8x512xf32> -> vector<8x512xf32>
    %c0_9 = arith.constant 0 : index
    %c0_10 = arith.constant 0 : index
    %11 = vector.load %arg5[%c0_9, %c0_10] : memref<1x512xf32, #tpu.memory_space<vmem>>, vector<1x512xf32>
    %12 = vector.broadcast %11 : vector<1x512xf32> to vector<8x512xf32>
    %13 = arith.addf %10, %12 : vector<8x512xf32>
    %cst_11 = arith.constant 0.000000e+00 : f32
    %14 = vector.broadcast %cst_11 : f32 to vector<8x512xf32>
    %15 = arith.maximumf %13, %14 : vector<8x512xf32>
    %16 = arith.truncf %15 : vector<8x512xf32> to vector<8x512xbf16>
    %c0_12 = arith.constant 0 : index
    %c0_13 = arith.constant 0 : index
    %17 = vector.load %arg6[%c0_12, %c0_13] : memref<512x256xbf16, #tpu.memory_space<vmem>>, vector<512x256xbf16>
    %cst_14 = arith.constant dense<0.000000e+00> : vector<8x256xf32>
    %18 = tpu.matmul %16, %17, %cst_14 {dimension_numbers = #tpu.dot_dimension_numbers<[1], [0], [0], [1], [0, 0, 1, 1], [], []>} : vector<8x512xbf16>, vector<512x256xbf16>, vector<8x256xf32> -> vector<8x256xf32>
    %c0_15 = arith.constant 0 : index
    %c0_16 = arith.constant 0 : index
    %19 = vector.load %arg7[%c0_15, %c0_16] : memref<1x256xf32, #tpu.memory_space<vmem>>, vector<1x256xf32>
    %20 = vector.broadcast %19 : vector<1x256xf32> to vector<8x256xf32>
    %21 = arith.addf %18, %20 : vector<8x256xf32>
    %cst_17 = arith.constant 0.000000e+00 : f32
    %22 = vector.broadcast %cst_17 : f32 to vector<8x256xf32>
    %23 = arith.maximumf %21, %22 : vector<8x256xf32>
    %24 = arith.truncf %23 : vector<8x256xf32> to vector<8x256xbf16>
    %c0_18 = arith.constant 0 : index
    %c0_19 = arith.constant 0 : index
    %25 = vector.load %arg10[%c0_18, %c0_19] : memref<8x256xbf16, #tpu.memory_space<vmem>>, vector<8x256xbf16>
    tpu.vector_store %arg10[%c0_18, %c0_19], %24 {strides = array<i32>} : memref<8x256xbf16, #tpu.memory_space<vmem>>, vector<8x256xbf16>,
    %c0_20 = arith.constant 0 : index
    %c0_21 = arith.constant 0 : index
    %26 = vector.load %arg8[%c0_20, %c0_21] : memref<256x128xbf16, #tpu.memory_space<vmem>>, vector<256x128xbf16>
    %cst_22 = arith.constant dense<0.000000e+00> : vector<8x128xf32>
    %27 = tpu.matmul %24, %26, %cst_22 {dimension_numbers = #tpu.dot_dimension_numbers<[1], [0], [0], [1], [0, 0, 1, 1], [], []>} : vector<8x256xbf16>, vector<256x128xbf16>, vector<8x128xf32> -> vector<8x128xf32>
    %c0_23 = arith.constant 0 : index
    %c0_24 = arith.constant 0 : index
    %28 = vector.load %arg9[%c0_23, %c0_24] : memref<1x128xf32, #tpu.memory_space<vmem>>, vector<1x128xf32>
    %29 = vector.broadcast %28 : vector<1x128xf32> to vector<8x128xf32>
    %30 = arith.addf %27, %29 : vector<8x128xf32>
    %c0_25 = arith.constant 0 : index
    %c0_26 = arith.constant 0 : index
    %31 = vector.load %arg11[%c0_25, %c0_26] : memref<8x128xf32, #tpu.memory_space<vmem>>, vector<8x128xf32>
    tpu.vector_store %arg11[%c0_25, %c0_26], %30 {strides = array<i32>} : memref<8x128xf32, #tpu.memory_space<vmem>>, vector<8x128xf32>,
    return
  }
  func.func @transform_0(%arg0: i32) -> (i32, i32) {
    %c0_i32 = arith.constant 0 : i32
    %c0_i32_0 = arith.constant 0 : i32
    return %arg0, %c0_i32 : i32, i32
  }
  func.func @transform_1(%arg0: i32) -> (i32, i32) {
    %c0_i32 = arith.constant 0 : i32
    %c0_i32_0 = arith.constant 0 : i32
    %c0_i32_1 = arith.constant 0 : i32
    return %c0_i32, %c0_i32_0 : i32, i32
  }
  func.func @transform_2(%arg0: i32) -> (i32, i32) {
    %c0_i32 = arith.constant 0 : i32
    %c0_i32_0 = arith.constant 0 : i32
    %c0_i32_1 = arith.constant 0 : i32
    return %c0_i32, %c0_i32_0 : i32, i32
  }
  func.func @transform_3(%arg0: i32) -> (i32, i32) {
    %c0_i32 = arith.constant 0 : i32
    %c0_i32_0 = arith.constant 0 : i32
    %c0_i32_1 = arith.constant 0 : i32
    return %c0_i32, %c0_i32_0 : i32, i32
  }
  func.func @transform_4(%arg0: i32) -> (i32, i32) {
    %c0_i32 = arith.constant 0 : i32
    %c0_i32_0 = arith.constant 0 : i32
    %c0_i32_1 = arith.constant 0 : i32
    return %c0_i32, %c0_i32_0 : i32, i32
  }
  func.func @transform_5(%arg0: i32) -> (i32, i32) {
    %c0_i32 = arith.constant 0 : i32
    %c0_i32_0 = arith.constant 0 : i32
    %c0_i32_1 = arith.constant 0 : i32
    return %c0_i32, %c0_i32_0 : i32, i32
  }
  func.func @transform_6(%arg0: i32) -> (i32, i32) {
    %c0_i32 = arith.constant 0 : i32
    %c0_i32_0 = arith.constant 0 : i32
    %c0_i32_1 = arith.constant 0 : i32
    return %c0_i32, %c0_i32_0 : i32, i32
  }
  func.func @transform_7(%arg0: i32) -> (i32, i32) {
    %c0_i32 = arith.constant 0 : i32
    %c0_i32_0 = arith.constant 0 : i32
    %c0_i32_1 = arith.constant 0 : i32
    return %c0_i32, %c0_i32_0 : i32, i32
  }
  func.func @transform_8(%arg0: i32) -> (i32, i32) {
    %c0_i32 = arith.constant 0 : i32
    %c0_i32_0 = arith.constant 0 : i32
    %c0_i32_1 = arith.constant 0 : i32
    return %c0_i32, %c0_i32_0 : i32, i32
  }
  func.func @transform_9(%arg0: i32) -> (i32, i32) {
    %c0_i32 = arith.constant 0 : i32
    %c0_i32_0 = arith.constant 0 : i32
    return %arg0, %c0_i32 : i32, i32
  }
  func.func @transform_10(%arg0: i32) -> (i32, i32) {
    %c0_i32 = arith.constant 0 : i32
    %c0_i32_0 = arith.constant 0 : i32
    return %arg0, %c0_i32 : i32, i32
  }
}

</mosaic_0001>

<llo_original>
// kernel: tpu_custom_call.1
$region0: #{tpu_custom_call.1}
  #allocation0 [shape = 'u32[]', space=smem, size = 0x4, offset = 0x4, fixed_abs, tag = 'smem constant byte address 0x4 - core index']
  #allocation1 [shape = 'u32[144,128]{1,0:T(1,128)}', space=vmem, size = 0x12000, scoped, tag = 'internal scratch']
  %s0 = inlined_call_operand.hbm [shape: bf16[8,128], index: 0, kind: input, shape index: {}]
  %s1 = inlined_call_operand.hbm [shape: bf16[128,1024], index: 1, kind: input, shape index: {}]
  %s2 = inlined_call_operand.hbm [shape: f32[1,1024], index: 2, kind: input, shape index: {}]
  %s3 = inlined_call_operand.hbm [shape: bf16[1024,512], index: 3, kind: input, shape index: {}]
  %s4 = inlined_call_operand.vmem [shape: f32[1,512], index: 4, kind: input, shape index: {}]
  %s5 = inlined_call_operand.hbm [shape: bf16[512,256], index: 5, kind: input, shape index: {}]
  %s6 = inlined_call_operand.vmem [shape: f32[1,256], index: 6, kind: input, shape index: {}]
  %s7 = inlined_call_operand.hbm [shape: bf16[256,128], index: 7, kind: input, shape index: {}]
  %s8 = inlined_call_operand.vmem [shape: f32[1,128], index: 8, kind: input, shape index: {}]
  %s9 = inlined_call_operand.hbm [shape: bf16[8,256], index: 9, kind: output, shape index: {0}]
  %s10 = inlined_call_operand.hbm [shape: f32[8,128], index: 10, kind: output, shape index: {1}]
  %11 = xla_tuple %s9, %s10
  %s12 = sld [smem:[#allocation0]]
  $region78: #{tpu_custom_call.1} parent=0
    _
  %s14 = ssub.s32 1, %s12
  %s15 = scalar_select 0, %s14, %s12
  $region1: #{tpu_custom_call.1} parent=0
    #allocation2 [shape = 'u8[2048]{0}', space=vmem, size = 0x800, scoped, tag = 'input window, operand 0, single buffered']
    #allocation3 [shape = 's32[1]{0}', space=sflag, size = 0x4, scoped, tag = 'scoped memory for tpu_custom_call.1']
    #allocation4 [shape = 's32[1]{0}', space=sflag, size = 0x4, scoped, tag = 'scoped memory for tpu_custom_call.1']
    #allocation5 [shape = 'u8[262144]{0}', space=vmem, size = 0x40000, scoped, tag = 'input window, operand 1, single buffered']
    #allocation6 [shape = 's32[1]{0}', space=sflag, size = 0x4, scoped, tag = 'scoped memory for tpu_custom_call.1']
    #allocation7 [shape = 'u8[4096]{0}', space=vmem, size = 0x1000, scoped, tag = 'input window, operand 2, single buffered']
    #allocation8 [shape = 'u8[1048576]{0}', space=vmem, size = 0x100000, scoped, tag = 'input window, operand 3, single buffered']
    #allocation9 [shape = 's32[1]{0}', space=sflag, size = 0x4, scoped, tag = 'scoped memory for tpu_custom_call.1']
    #allocation10 [shape = 'u8[262144]{0}', space=vmem, size = 0x40000, scoped, tag = 'input window, operand 5, single buffered']
    #allocation11 [shape = 'u8[65536]{0}', space=vmem, size = 0x10000, scoped, tag = 'input window, operand 7, single buffered']
    #allocation12 [shape = 's32[1]{0}', space=sflag, size = 0x4, scoped, tag = 'scoped memory for tpu_custom_call.1']
    #allocation13 [shape = 'u8[4096]{0}', space=vmem, size = 0x1000, scoped, tag = 'output window, operand 0, single buffered']
    #allocation14 [shape = 'u8[4096]{0}', space=vmem, size = 0x1000, scoped, tag = 'output window, operand 1, single buffered']
    #allocation15 [shape = 's32[1]{0}', space=sflag, size = 0x4, scoped, tag = 'scoped memory for tpu_custom_call.1']
    %16 = vsyncpa [#allocation3], 0
    %17 = vsyncpa [#allocation6], 0
    %18 = vsyncpa [#allocation9], 0
    %19 = vsyncpa [#allocation12], 0
    %20 = vsyncpa [#allocation4], 0
    %21 = vsyncpa [#allocation15], 0
    // Predicated region
    $region2: #{tpu_custom_call.1} parent=1 // pred_check
      _
    $region3: #{tpu_custom_call.1} parent=1 // pred_check_branch
      %23 = sbr.rel (0) target = $region5
    $region4: #{tpu_custom_call.1} parent=1 // pred_region
      %s25 = ssub.s32 64, 64
      %26 = vsyncadd [#allocation3], %s25
      %s28 = sshll.u32 [#allocation2], 4
      %s29 = int_to_ptr.vmem [resolvable:$true] %s28
      %31 = dma.hbm_to_vmem [thread:$0]  %s0, 64, %s29, [#allocation3]
    $region5: #{tpu_custom_call.1} parent=1 // pred_fallthru
      _
    // Predicated region
    $region6: #{tpu_custom_call.1} parent=1 // pred_check
      _
    $region7: #{tpu_custom_call.1} parent=1 // pred_check_branch
      %33 = sbr.rel (0) target = $region9
    $region8: #{tpu_custom_call.1} parent=1 // pred_region
      %s35 = ssub.s32 8192, 8192
      %36 = vsyncadd [#allocation6], %s35
      %s37 = sshll.u32 [#allocation5], 4
      %s38 = int_to_ptr.vmem [resolvable:$true] %s37
      %43 = dma.hbm_to_vmem [thread:$0]  %s1, 8192, %s38, [#allocation6], 512, 512, 32
    $region9: #{tpu_custom_call.1} parent=1 // pred_fallthru
      _
    // Predicated region
    $region10: #{tpu_custom_call.1} parent=1 // pred_check
      _
    $region11: #{tpu_custom_call.1} parent=1 // pred_check_branch
      %45 = sbr.rel (0) target = $region13
    $region12: #{tpu_custom_call.1} parent=1 // pred_region
      %s47 = ssub.s32 128, 128
      %48 = vsyncadd [#allocation6], %s47
      %s50 = sshll.u32 [#allocation7], 4
      %s51 = int_to_ptr.vmem [resolvable:$true] %s50
      %53 = dma.hbm_to_vmem [thread:$0]  %s2, 128, %s51, [#allocation6]
    $region13: #{tpu_custom_call.1} parent=1 // pred_fallthru
      _
    // Predicated region
    $region14: #{tpu_custom_call.1} parent=1 // pred_check
      _
    $region15: #{tpu_custom_call.1} parent=1 // pred_check_branch
      %55 = sbr.rel (0) target = $region17
    $region16: #{tpu_custom_call.1} parent=1 // pred_region
      %s57 = ssub.s32 32768, 32768
      %58 = vsyncadd [#allocation9], %s57
      %s59 = sshll.u32 [#allocation8], 4
      %s60 = int_to_ptr.vmem [resolvable:$true] %s59
      %65 = dma.hbm_to_vmem [thread:$0]  %s3, 32768, %s60, [#allocation9], 256, 256, 16
    $region17: #{tpu_custom_call.1} parent=1 // pred_fallthru
      _
    // Predicated region
    $region18: #{tpu_custom_call.1} parent=1 // pred_check
      _
    $region19: #{tpu_custom_call.1} parent=1 // pred_check_branch
      %67 = sbr.rel (0) target = $region21
    $region20: #{tpu_custom_call.1} parent=1 // pred_region
      _
    $region21: #{tpu_custom_call.1} parent=1 // pred_fallthru
      _
    // Predicated region
    $region22: #{tpu_custom_call.1} parent=1 // pred_check
      _
    $region23: #{tpu_custom_call.1} parent=1 // pred_check_branch
      %69 = sbr.rel (0) target = $region25
    $region24: #{tpu_custom_call.1} parent=1 // pred_region
      %s71 = ssub.s32 8192, 8192
      %72 = vsyncadd [#allocation9], %s71
      %s73 = sshll.u32 [#allocation10], 4
      %s74 = int_to_ptr.vmem [resolvable:$true] %s73
      %79 = dma.hbm_to_vmem [thread:$0]  %s5, 8192, %s74, [#allocation9], 128, 128, 8
    $region25: #{tpu_custom_call.1} parent=1 // pred_fallthru
      _
    // Predicated region
    $region26: #{tpu_custom_call.1} parent=1 // pred_check
      _
    $region27: #{tpu_custom_call.1} parent=1 // pred_check_branch
      %81 = sbr.rel (0) target = $region29
    $region28: #{tpu_custom_call.1} parent=1 // pred_region
      _
    $region29: #{tpu_custom_call.1} parent=1 // pred_fallthru
      _
    // Predicated region
    $region30: #{tpu_custom_call.1} parent=1 // pred_check
      _
    $region31: #{tpu_custom_call.1} parent=1 // pred_check_branch
      %83 = sbr.rel (0) target = $region33
    $region32: #{tpu_custom_call.1} parent=1 // pred_region
      %s85 = ssub.s32 2048, 2048
      %86 = vsyncadd [#allocation12], %s85
      %s87 = sshll.u32 [#allocation11], 4
      %s88 = int_to_ptr.vmem [resolvable:$true] %s87
      %93 = dma.hbm_to_vmem [thread:$0]  %s7, 2048, %s88, [#allocation12], 64, 64, 4
    $region33: #{tpu_custom_call.1} parent=1 // pred_fallthru
      _
    // Predicated region
    $region34: #{tpu_custom_call.1} parent=1 // pred_check
      _
    $region35: #{tpu_custom_call.1} parent=1 // pred_check_branch
      %95 = sbr.rel (0) target = $region37
    $region36: #{tpu_custom_call.1} parent=1 // pred_region
      _
    $region37: #{tpu_custom_call.1} parent=1 // pred_fallthru
      _
    // Predicated region
    $region38: #{tpu_custom_call.1} parent=1 // pred_check
      _
    $region39: #{tpu_custom_call.1} parent=1 // pred_check_branch
      %97 = sbr.rel (0) target = $region41
    $region40: #{tpu_custom_call.1} parent=1 // pred_region
      %98 = dma.done [#allocation3], 64
    $region41: #{tpu_custom_call.1} parent=1 // pred_fallthru
      _
    // Predicated region
    $region42: #{tpu_custom_call.1} parent=1 // pred_check
      _
    $region43: #{tpu_custom_call.1} parent=1 // pred_check_branch
      %100 = sbr.rel (0) target = $region45
    $region44: #{tpu_custom_call.1} parent=1 // pred_region
      %101 = dma.done [#allocation6], 8192
    $region45: #{tpu_custom_call.1} parent=1 // pred_fallthru
      _
    // Predicated region
    $region46: #{tpu_custom_call.1} parent=1 // pred_check
      _
    $region47: #{tpu_custom_call.1} parent=1 // pred_check_branch
      %103 = sbr.rel (0) target = $region49
    $region48: #{tpu_custom_call.1} parent=1 // pred_region
      %104 = dma.done [#allocation6], 128
    $region49: #{tpu_custom_call.1} parent=1 // pred_fallthru
      _
    // Predicated region
    $region50: #{tpu_custom_call.1} parent=1 // pred_check
      _
    $region51: #{tpu_custom_call.1} parent=1 // pred_check_branch
      %106 = sbr.rel (0) target = $region53
    $region52: #{tpu_custom_call.1} parent=1 // pred_region
      %107 = dma.done [#allocation9], 32768
    $region53: #{tpu_custom_call.1} parent=1 // pred_fallthru
      _
    // Predicated region
    $region54: #{tpu_custom_call.1} parent=1 // pred_check
      _
    $region55: #{tpu_custom_call.1} parent=1 // pred_check_branch
      %109 = sbr.rel (0) target = $region57
    $region56: #{tpu_custom_call.1} parent=1 // pred_region
      %110 = dma.done [#allocation9], 8192
    $region57: #{tpu_custom_call.1} parent=1 // pred_fallthru
      _
    // Predicated region
    $region58: #{tpu_custom_call.1} parent=1 // pred_check
      _
    $region59: #{tpu_custom_call.1} parent=1 // pred_check_branch
      %112 = sbr.rel (0) target = $region61
    $region60: #{tpu_custom_call.1} parent=1 // pred_region
      %113 = dma.done [#allocation12], 2048
    $region61: #{tpu_custom_call.1} parent=1 // pred_fallthru
      _
    %v115 = vld [vmem:[#allocation2] sm:$0xf]
    %v116 = vld [vmem:[#allocation5] sm:$0xff]
    %v117 = vld [vmem:[#allocation5 + $0x8] sm:$0xff]
    %v118 = vld [vmem:[#allocation5 + $0x10] sm:$0xff]
    %v119 = vld [vmem:[#allocation5 + $0x18] sm:$0xff]
    %v120 = vld [vmem:[#allocation5 + $0x20] sm:$0xff]
    %v121 = vld [vmem:[#allocation5 + $0x28] sm:$0xff]
    %v122 = vld [vmem:[#allocation5 + $0x30] sm:$0xff]
    %v123 = vld [vmem:[#allocation5 + $0x38] sm:$0xff]
    %v124 = vld [vmem:[#allocation5 + $0x40] sm:$0xff]
    %v125 = vld [vmem:[#allocation5 + $0x48] sm:$0xff]
    %v126 = vld [vmem:[#allocation5 + $0x50] sm:$0xff]
    %v127 = vld [vmem:[#allocation5 + $0x58] sm:$0xff]
    %v128 = vld [vmem:[#allocation5 + $0x60] sm:$0xff]
    %v129 = vld [vmem:[#allocation5 + $0x68] sm:$0xff]
    %v130 = vld [vmem:[#allocation5 + $0x70] sm:$0xff]
    %v131 = vld [vmem:[#allocation5 + $0x78] sm:$0xff]
    %v132 = vld [vmem:[#allocation5 + $0x80] sm:$0xff]
    %v133 = vld [vmem:[#allocation5 + $0x88] sm:$0xff]
    %v134 = vld [vmem:[#allocation5 + $0x90] sm:$0xff]
    %v135 = vld [vmem:[#allocation5 + $0x98] sm:$0xff]
    %v136 = vld [vmem:[#allocation5 + $0xa0] sm:$0xff]
    %v137 = vld [vmem:[#allocation5 + $0xa8] sm:$0xff]
    %v138 = vld [vmem:[#allocation5 + $0xb0] sm:$0xff]
    %v139 = vld [vmem:[#allocation5 + $0xb8] sm:$0xff]
    %v140 = vld [vmem:[#allocation5 + $0xc0] sm:$0xff]
    %v141 = vld [vmem:[#allocation5 + $0xc8] sm:$0xff]
    %v142 = vld [vmem:[#allocation5 + $0xd0] sm:$0xff]
    %v143 = vld [vmem:[#allocation5 + $0xd8] sm:$0xff]
    %v144 = vld [vmem:[#allocation5 + $0xe0] sm:$0xff]
    %v145 = vld [vmem:[#allocation5 + $0xe8] sm:$0xff]
    %v146 = vld [vmem:[#allocation5 + $0xf0] sm:$0xff]
    %v147 = vld [vmem:[#allocation5 + $0xf8] sm:$0xff]
    %v148 = vld [vmem:[#allocation5 + $0x100] sm:$0xff]
    %v149 = vld [vmem:[#allocation5 + $0x108] sm:$0xff]
    %v150 = vld [vmem:[#allocation5 + $0x110] sm:$0xff]
    %v151 = vld [vmem:[#allocation5 + $0x118] sm:$0xff]
    %v152 = vld [vmem:[#allocation5 + $0x120] sm:$0xff]
    %v153 = vld [vmem:[#allocation5 + $0x128] sm:$0xff]
    %v154 = vld [vmem:[#allocation5 + $0x130] sm:$0xff]
    %v155 = vld [vmem:[#allocation5 + $0x138] sm:$0xff]
    %v156 = vld [vmem:[#allocation5 + $0x140] sm:$0xff]
    %v157 = vld [vmem:[#allocation5 + $0x148] sm:$0xff]
    %v158 = vld [vmem:[#allocation5 + $0x150] sm:$0xff]
    %v159 = vld [vmem:[#allocation5 + $0x158] sm:$0xff]
    %v160 = vld [vmem:[#allocation5 + $0x160] sm:$0xff]
    %v161 = vld [vmem:[#allocation5 + $0x168] sm:$0xff]
    %v162 = vld [vmem:[#allocation5 + $0x170] sm:$0xff]
    %v163 = vld [vmem:[#allocation5 + $0x178] sm:$0xff]
    %v164 = vld [vmem:[#allocation5 + $0x180] sm:$0xff]
    %v165 = vld [vmem:[#allocation5 + $0x188] sm:$0xff]
    %v166 = vld [vmem:[#allocation5 + $0x190] sm:$0xff]
    %v167 = vld [vmem:[#allocation5 + $0x198] sm:$0xff]
    %v168 = vld [vmem:[#allocation5 + $0x1a0] sm:$0xff]
    %v169 = vld [vmem:[#allocation5 + $0x1a8] sm:$0xff]
    %v170 = vld [vmem:[#allocation5 + $0x1b0] sm:$0xff]
    %v171 = vld [vmem:[#allocation5 + $0x1b8] sm:$0xff]
    %v172 = vld [vmem:[#allocation5 + $0x1c0] sm:$0xff]
    %v173 = vld [vmem:[#allocation5 + $0x1c8] sm:$0xff]
    %v174 = vld [vmem:[#allocation5 + $0x1d0] sm:$0xff]
    %v175 = vld [vmem:[#allocation5 + $0x1d8] sm:$0xff]
    %v176 = vld [vmem:[#allocation5 + $0x1e0] sm:$0xff]
    %v177 = vld [vmem:[#allocation5 + $0x1e8] sm:$0xff]
    %v178 = vld [vmem:[#allocation5 + $0x1f0] sm:$0xff]
    %v179 = vld [vmem:[#allocation5 + $0x1f8] sm:$0xff]
    %v180 = vld [vmem:[#allocation7] sm:$0xff]
    %v182 = vlaneseq
    %v183 = vshrl.u32 %v182, 7
    %v184 = vsub.s32 0, %v183
    %v185 = vrot.slane %v180, %v184
    %v186 = vlaneseq
    %v187 = vshrl.u32 %v186, 7
    %v188 = vsub.s32 1, %v187
    %v189 = vrot.slane %v180, %v188
    %v190 = vlaneseq
    %v191 = vshrl.u32 %v190, 7
    %v192 = vsub.s32 2, %v191
    %v193 = vrot.slane %v180, %v192
    %v194 = vlaneseq
    %v195 = vshrl.u32 %v194, 7
    %v196 = vsub.s32 3, %v195
    %v197 = vrot.slane %v180, %v196
    %v198 = vlaneseq
    %v199 = vshrl.u32 %v198, 7
    %v200 = vsub.s32 4, %v199
    %v201 = vrot.slane %v180, %v200
    %v202 = vlaneseq
    %v203 = vshrl.u32 %v202, 7
    %v204 = vsub.s32 5, %v203
    %v205 = vrot.slane %v180, %v204
    %v206 = vlaneseq
    %v207 = vshrl.u32 %v206, 7
    %v208 = vsub.s32 6, %v207
    %v209 = vrot.slane %v180, %v208
    %v210 = vlaneseq
    %v211 = vshrl.u32 %v210, 7
    %v212 = vsub.s32 7, %v211
    %v213 = vrot.slane %v180, %v212
    %v286 = vunpack.c.l.b16 %v116
    %v287 = vunpack.c.h.b16 %v116
    %v288 = vunpack.c.l.b16 %v117
    %v289 = vunpack.c.h.b16 %v117
    %v290 = vunpack.c.l.b16 %v118
    %v291 = vunpack.c.h.b16 %v118
    %v292 = vunpack.c.l.b16 %v119
    %v293 = vunpack.c.h.b16 %v119
    %v294 = vunpack.c.l.b16 %v120
    %v295 = vunpack.c.h.b16 %v120
    %v296 = vunpack.c.l.b16 %v121
    %v297 = vunpack.c.h.b16 %v121
    %v298 = vunpack.c.l.b16 %v122
    %v299 = vunpack.c.h.b16 %v122
    %v300 = vunpack.c.l.b16 %v123
    %v301 = vunpack.c.h.b16 %v123
    %v302 = vunpack.c.l.b16 %v124
    %v303 = vunpack.c.h.b16 %v124
    %v304 = vunpack.c.l.b16 %v125
    %v305 = vunpack.c.h.b16 %v125
    %v306 = vunpack.c.l.b16 %v126
    %v307 = vunpack.c.h.b16 %v126
    %v308 = vunpack.c.l.b16 %v127
    %v309 = vunpack.c.h.b16 %v127
    %v310 = vunpack.c.l.b16 %v128
    %v311 = vunpack.c.h.b16 %v128
    %v312 = vunpack.c.l.b16 %v129
    %v313 = vunpack.c.h.b16 %v129
    %v314 = vunpack.c.l.b16 %v130
    %v315 = vunpack.c.h.b16 %v130
    %v316 = vunpack.c.l.b16 %v131
    %v317 = vunpack.c.h.b16 %v131
    %v318 = vunpack.c.l.b16 %v132
    %v319 = vunpack.c.h.b16 %v132
    %v320 = vunpack.c.l.b16 %v133
    %v321 = vunpack.c.h.b16 %v133
    %v322 = vunpack.c.l.b16 %v134
    %v323 = vunpack.c.h.b16 %v134
    %v324 = vunpack.c.l.b16 %v135
    %v325 = vunpack.c.h.b16 %v135
    %v326 = vunpack.c.l.b16 %v136
    %v327 = vunpack.c.h.b16 %v136
    %v328 = vunpack.c.l.b16 %v137
    %v329 = vunpack.c.h.b16 %v137
    %v330 = vunpack.c.l.b16 %v138
    %v331 = vunpack.c.h.b16 %v138
    %v332 = vunpack.c.l.b16 %v139
    %v333 = vunpack.c.h.b16 %v139
    %v334 = vunpack.c.l.b16 %v140
    %v335 = vunpack.c.h.b16 %v140
    %v336 = vunpack.c.l.b16 %v141
    %v337 = vunpack.c.h.b16 %v141
    %v338 = vunpack.c.l.b16 %v142
    %v339 = vunpack.c.h.b16 %v142
    %v340 = vunpack.c.l.b16 %v143
    %v341 = vunpack.c.h.b16 %v143
    %v342 = vunpack.c.l.b16 %v144
    %v343 = vunpack.c.h.b16 %v144
    %v344 = vunpack.c.l.b16 %v145
    %v345 = vunpack.c.h.b16 %v145
    %v346 = vunpack.c.l.b16 %v146
    %v347 = vunpack.c.h.b16 %v146
    %v348 = vunpack.c.l.b16 %v147
    %v349 = vunpack.c.h.b16 %v147
    %v350 = vunpack.c.l.b16 %v148
    %v351 = vunpack.c.h.b16 %v148
    %v352 = vunpack.c.l.b16 %v149
    %v353 = vunpack.c.h.b16 %v149
    %v354 = vunpack.c.l.b16 %v150
    %v355 = vunpack.c.h.b16 %v150
    %v356 = vunpack.c.l.b16 %v151
    %v357 = vunpack.c.h.b16 %v151
    %v358 = vunpack.c.l.b16 %v152
    %v359 = vunpack.c.h.b16 %v152
    %v360 = vunpack.c.l.b16 %v153
    %v361 = vunpack.c.h.b16 %v153
    %v362 = vunpack.c.l.b16 %v154
    %v363 = vunpack.c.h.b16 %v154
    %v364 = vunpack.c.l.b16 %v155
    %v365 = vunpack.c.h.b16 %v155
    %v366 = vunpack.c.l.b16 %v156
    %v367 = vunpack.c.h.b16 %v156
    %v368 = vunpack.c.l.b16 %v157
    %v369 = vunpack.c.h.b16 %v157
    %v370 = vunpack.c.l.b16 %v158
    %v371 = vunpack.c.h.b16 %v158
    %v372 = vunpack.c.l.b16 %v159
    %v373 = vunpack.c.h.b16 %v159
    %v374 = vunpack.c.l.b16 %v160
    %v375 = vunpack.c.h.b16 %v160
    %v376 = vunpack.c.l.b16 %v161
    %v377 = vunpack.c.h.b16 %v161
    %v378 = vunpack.c.l.b16 %v162
    %v379 = vunpack.c.h.b16 %v162
    %v380 = vunpack.c.l.b16 %v163
    %v381 = vunpack.c.h.b16 %v163
    %v382 = vunpack.c.l.b16 %v164
    %v383 = vunpack.c.h.b16 %v164
    %v384 = vunpack.c.l.b16 %v165
    %v385 = vunpack.c.h.b16 %v165
    %v386 = vunpack.c.l.b16 %v166
    %v387 = vunpack.c.h.b16 %v166
    %v388 = vunpack.c.l.b16 %v167
    %v389 = vunpack.c.h.b16 %v167
    %v390 = vunpack.c.l.b16 %v168
    %v391 = vunpack.c.h.b16 %v168
    %v392 = vunpack.c.l.b16 %v169
    %v393 = vunpack.c.h.b16 %v169
    %v394 = vunpack.c.l.b16 %v170
    %v395 = vunpack.c.h.b16 %v170
    %v396 = vunpack.c.l.b16 %v171
    %v397 = vunpack.c.h.b16 %v171
    %v398 = vunpack.c.l.b16 %v172
    %v399 = vunpack.c.h.b16 %v172
    %v400 = vunpack.c.l.b16 %v173
    %v401 = vunpack.c.h.b16 %v173
    %v402 = vunpack.c.l.b16 %v174
    %v403 = vunpack.c.h.b16 %v174
    %v404 = vunpack.c.l.b16 %v175
    %v405 = vunpack.c.h.b16 %v175
    %v406 = vunpack.c.l.b16 %v176
    %v407 = vunpack.c.h.b16 %v176
    %v408 = vunpack.c.l.b16 %v177
    %v409 = vunpack.c.h.b16 %v177
    %v410 = vunpack.c.l.b16 %v178
    %v411 = vunpack.c.h.b16 %v178
    %v412 = vunpack.c.l.b16 %v179
    %v413 = vunpack.c.h.b16 %v179
    %v414 = vpack.c.b16 %v294, %v286
    %v415 = vpack.c.b16 %v295, %v287
    %v416 = vpack.c.b16 %v296, %v288
    %v417 = vpack.c.b16 %v297, %v289
    %v418 = vpack.c.b16 %v298, %v290
    %v419 = vpack.c.b16 %v299, %v291
    %v420 = vpack.c.b16 %v300, %v292
    %v421 = vpack.c.b16 %v301, %v293
    %v422 = vpack.c.b16 %v310, %v302
    %v423 = vpack.c.b16 %v311, %v303
    %v424 = vpack.c.b16 %v312, %v304
    %v425 = vpack.c.b16 %v313, %v305
    %v426 = vpack.c.b16 %v314, %v306
    %v427 = vpack.c.b16 %v315, %v307
    %v428 = vpack.c.b16 %v316, %v308
    %v429 = vpack.c.b16 %v317, %v309
    %v430 = vpack.c.b16 %v326, %v318
    %v431 = vpack.c.b16 %v327, %v319
    %v432 = vpack.c.b16 %v328, %v320
    %v433 = vpack.c.b16 %v329, %v321
    %v434 = vpack.c.b16 %v330, %v322
    %v435 = vpack.c.b16 %v331, %v323
    %v436 = vpack.c.b16 %v332, %v324
    %v437 = vpack.c.b16 %v333, %v325
    %v438 = vpack.c.b16 %v342, %v334
    %v439 = vpack.c.b16 %v343, %v335
    %v440 = vpack.c.b16 %v344, %v336
    %v441 = vpack.c.b16 %v345, %v337
    %v442 = vpack.c.b16 %v346, %v338
    %v443 = vpack.c.b16 %v347, %v339
    %v444 = vpack.c.b16 %v348, %v340
    %v445 = vpack.c.b16 %v349, %v341
    %v446 = vpack.c.b16 %v358, %v350
    %v447 = vpack.c.b16 %v359, %v351
    %v448 = vpack.c.b16 %v360, %v352
    %v449 = vpack.c.b16 %v361, %v353
    %v450 = vpack.c.b16 %v362, %v354
    %v451 = vpack.c.b16 %v363, %v355
    %v452 = vpack.c.b16 %v364, %v356
    %v453 = vpack.c.b16 %v365, %v357
    %v454 = vpack.c.b16 %v374, %v366
    %v455 = vpack.c.b16 %v375, %v367
    %v456 = vpack.c.b16 %v376, %v368
    %v457 = vpack.c.b16 %v377, %v369
    %v458 = vpack.c.b16 %v378, %v370
    %v459 = vpack.c.b16 %v379, %v371
    %v460 = vpack.c.b16 %v380, %v372
    %v461 = vpack.c.b16 %v381, %v373
    %v462 = vpack.c.b16 %v390, %v382
    %v463 = vpack.c.b16 %v391, %v383
    %v464 = vpack.c.b16 %v392, %v384
    %v465 = vpack.c.b16 %v393, %v385
    %v466 = vpack.c.b16 %v394, %v386
    %v467 = vpack.c.b16 %v395, %v387
    %v468 = vpack.c.b16 %v396, %v388
    %v469 = vpack.c.b16 %v397, %v389
    %v470 = vpack.c.b16 %v406, %v398
    %v471 = vpack.c.b16 %v407, %v399
    %v472 = vpack.c.b16 %v408, %v400
    %v473 = vpack.c.b16 %v409, %v401
    %v474 = vpack.c.b16 %v410, %v402
    %v475 = vpack.c.b16 %v411, %v403
    %v476 = vpack.c.b16 %v412, %v404
    %v477 = vpack.c.b16 %v413, %v405
    %542 = vmatprep.subr.bf16.mxu0 %v415
    %543 = vmatpush1.bf16.msra.mxu0 %v414
    %544 = vmatprep.subr.bf16.mxu0 %v423
    %545 = vmatpush1.bf16.msra.mxu0 %v422
    %546 = vmatprep.subr.bf16.mxu0 %v431
    %547 = vmatpush1.bf16.msra.mxu0 %v430
    %548 = vmatprep.subr.bf16.mxu0 %v439
    %549 = vmatpush1.bf16.msra.mxu0 %v438
    %550 = vmatprep.subr.bf16.mxu0 %v447
    %551 = vmatpush1.bf16.msra.mxu0 %v446
    %552 = vmatprep.subr.bf16.mxu0 %v455
    %553 = vmatpush1.bf16.msra.mxu0 %v454
    %554 = vmatprep.subr.bf16.mxu0 %v463
    %555 = vmatpush1.bf16.msra.mxu0 %v462
    %556 = vmatprep.subr.bf16.mxu0 %v471
    %557 = vmatpush1.bf16.msra.mxu0 %v470
    %558 = vmatprep.subr.bf16.mxu0 0
    %559 = vmatpush1.bf16.msra.mxu0 0
    %560 = vmatprep.subr.bf16.mxu0 0
    %561 = vmatpush1.bf16.msra.mxu0 0
    %562 = vmatprep.subr.bf16.mxu0 0
    %563 = vmatpush1.bf16.msra.mxu0 0
    %564 = vmatprep.subr.bf16.mxu0 0
    %565 = vmatpush1.bf16.msra.mxu0 0
    %566 = vmatprep.subr.bf16.mxu0 0
    %567 = vmatpush1.bf16.msra.mxu0 0
    %568 = vmatprep.subr.bf16.mxu0 0
    %569 = vmatpush1.bf16.msra.mxu0 0
    %570 = vmatprep.subr.bf16.mxu0 0
    %571 = vmatpush1.bf16.msra.mxu0 0
    %572 = vmatprep.subr.bf16.mxu0 0
    %573 = vmatpush1.bf16.msra.mxu0 0
    %574 = vmatprep.mubr.bf16.mxu0 0
    %575 = vmatmul.mubr.bf16.gmra.mrb[0].mxu0 %v115
    %v576 = vpop.f32.mrb[0].mxu0
    %v577 = vadd.f32 %v185, %v576
    %v578 = vpop.f32.mrb[0].mxu0
    %v579 = vadd.f32 %v189, %v578
    %v580 = vpop.f32.mrb[0].mxu0
    %v581 = vpop.f32.mrb[0].mxu0
    %582 = vdwg.mxu0
    %583 = vmatprep.subr.bf16.mxu0 %v417
    %584 = vmatpush1.bf16.msra.mxu0 %v416
    %585 = vmatprep.subr.bf16.mxu0 %v425
    %586 = vmatpush1.bf16.msra.mxu0 %v424
    %587 = vmatprep.subr.bf16.mxu0 %v433
    %588 = vmatpush1.bf16.msra.mxu0 %v432
    %589 = vmatprep.subr.bf16.mxu0 %v441
    %590 = vmatpush1.bf16.msra.mxu0 %v440
    %591 = vmatprep.subr.bf16.mxu0 %v449
    %592 = vmatpush1.bf16.msra.mxu0 %v448
    %593 = vmatprep.subr.bf16.mxu0 %v457
    %594 = vmatpush1.bf16.msra.mxu0 %v456
    %595 = vmatprep.subr.bf16.mxu0 %v465
    %596 = vmatpush1.bf16.msra.mxu0 %v464
    %597 = vmatprep.subr.bf16.mxu0 %v473
    %598 = vmatpush1.bf16.msra.mxu0 %v472
    %599 = vmatprep.subr.bf16.mxu0 0
    %600 = vmatpush1.bf16.msra.mxu0 0
    %601 = vmatprep.subr.bf16.mxu0 0
    %602 = vmatpush1.bf16.msra.mxu0 0
    %603 = vmatprep.subr.bf16.mxu0 0
    %604 = vmatpush1.bf16.msra.mxu0 0
    %605 = vmatprep.subr.bf16.mxu0 0
    %606 = vmatpush1.bf16.msra.mxu0 0
    %607 = vmatprep.subr.bf16.mxu0 0
    %608 = vmatpush1.bf16.msra.mxu0 0
    %609 = vmatprep.subr.bf16.mxu0 0
    %610 = vmatpush1.bf16.msra.mxu0 0
    %611 = vmatprep.subr.bf16.mxu0 0
    %612 = vmatpush1.bf16.msra.mxu0 0
    %613 = vmatprep.subr.bf16.mxu0 0
    %614 = vmatpush1.bf16.msra.mxu0 0
    %615 = vmatprep.mubr.bf16.mxu0 0
    %616 = vmatmul.mubr.bf16.gmra.mrb[0].mxu0 %v115
    %v617 = vpop.f32.mrb[0].mxu0
    %v618 = vadd.f32 %v193, %v617
    %v619 = vpop.f32.mrb[0].mxu0
    %v620 = vadd.f32 %v197, %v619
    %v621 = vpop.f32.mrb[0].mxu0
    %v622 = vpop.f32.mrb[0].mxu0
    %623 = vdwg.mxu0
    %624 = vmatprep.subr.bf16.mxu0 %v419
    %625 = vmatpush1.bf16.msra.mxu0 %v418
    %626 = vmatprep.subr.bf16.mxu0 %v427
    %627 = vmatpush1.bf16.msra.mxu0 %v426
    %628 = vmatprep.subr.bf16.mxu0 %v435
    %629 = vmatpush1.bf16.msra.mxu0 %v434
    %630 = vmatprep.subr.bf16.mxu0 %v443
    %631 = vmatpush1.bf16.msra.mxu0 %v442
    %632 = vmatprep.subr.bf16.mxu0 %v451
    %633 = vmatpush1.bf16.msra.mxu0 %v450
    %634 = vmatprep.subr.bf16.mxu0 %v459
    %635 = vmatpush1.bf16.msra.mxu0 %v458
    %636 = vmatprep.subr.bf16.mxu0 %v467
    %637 = vmatpush1.bf16.msra.mxu0 %v466
    %638 = vmatprep.subr.bf16.mxu0 %v475
    %639 = vmatpush1.bf16.msra.mxu0 %v474
    %640 = vmatprep.subr.bf16.mxu0 0
    %641 = vmatpush1.bf16.msra.mxu0 0
    %642 = vmatprep.subr.bf16.mxu0 0
    %643 = vmatpush1.bf16.msra.mxu0 0
    %644 = vmatprep.subr.bf16.mxu0 0
    %645 = vmatpush1.bf16.msra.mxu0 0
    %646 = vmatprep.subr.bf16.mxu0 0
    %647 = vmatpush1.bf16.msra.mxu0 0
    %648 = vmatprep.subr.bf16.mxu0 0
    %649 = vmatpush1.bf16.msra.mxu0 0
    %650 = vmatprep.subr.bf16.mxu0 0
    %651 = vmatpush1.bf16.msra.mxu0 0
    %652 = vmatprep.subr.bf16.mxu0 0
    %653 = vmatpush1.bf16.msra.mxu0 0
    %654 = vmatprep.subr.bf16.mxu0 0
    %655 = vmatpush1.bf16.msra.mxu0 0
    %656 = vmatprep.mubr.bf16.mxu0 0
    %657 = vmatmul.mubr.bf16.gmra.mrb[0].mxu0 %v115
    %v658 = vpop.f32.mrb[0].mxu0
    %v659 = vadd.f32 %v201, %v658
    %v660 = vpop.f32.mrb[0].mxu0
    %v661 = vadd.f32 %v205, %v660
    %v662 = vpop.f32.mrb[0].mxu0
    %v663 = vpop.f32.mrb[0].mxu0
    %664 = vdwg.mxu0
    %665 = vmatprep.subr.bf16.mxu0 %v421
    %666 = vmatpush1.bf16.msra.mxu0 %v420
    %667 = vmatprep.subr.bf16.mxu0 %v429
    %668 = vmatpush1.bf16.msra.mxu0 %v428
    %669 = vmatprep.subr.bf16.mxu0 %v437
    %670 = vmatpush1.bf16.msra.mxu0 %v436
    %671 = vmatprep.subr.bf16.mxu0 %v445
    %672 = vmatpush1.bf16.msra.mxu0 %v444
    %673 = vmatprep.subr.bf16.mxu0 %v453
    %674 = vmatpush1.bf16.msra.mxu0 %v452
    %675 = vmatprep.subr.bf16.mxu0 %v461
    %676 = vmatpush1.bf16.msra.mxu0 %v460
    %677 = vmatprep.subr.bf16.mxu0 %v469
    %678 = vmatpush1.bf16.msra.mxu0 %v468
    %679 = vmatprep.subr.bf16.mxu0 %v477
    %680 = vmatpush1.bf16.msra.mxu0 %v476
    %681 = vmatprep.subr.bf16.mxu0 0
    %682 = vmatpush1.bf16.msra.mxu0 0
    %683 = vmatprep.subr.bf16.mxu0 0
    %684 = vmatpush1.bf16.msra.mxu0 0
    %685 = vmatprep.subr.bf16.mxu0 0
    %686 = vmatpush1.bf16.msra.mxu0 0
    %687 = vmatprep.subr.bf16.mxu0 0
    %688 = vmatpush1.bf16.msra.mxu0 0
    %689 = vmatprep.subr.bf16.mxu0 0
    %690 = vmatpush1.bf16.msra.mxu0 0
    %691 = vmatprep.subr.bf16.mxu0 0
    %692 = vmatpush1.bf16.msra.mxu0 0
    %693 = vmatprep.subr.bf16.mxu0 0
    %694 = vmatpush1.bf16.msra.mxu0 0
    %695 = vmatprep.subr.bf16.mxu0 0
    %696 = vmatpush1.bf16.msra.mxu0 0
    %697 = vmatprep.mubr.bf16.mxu0 0
    %698 = vmatmul.mubr.bf16.gmra.mrb[0].mxu0 %v115
    %v699 = vpop.f32.mrb[0].mxu0
    %v700 = vadd.f32 %v209, %v699
    %v701 = vpop.f32.mrb[0].mxu0
    %v702 = vadd.f32 %v213, %v701
    %v703 = vpop.f32.mrb[0].mxu0
    %v704 = vpop.f32.mrb[0].mxu0
    %705 = vdwg.mxu0
    %v706 = vmax.f32 %v577, 0.0
    %v707 = vmax.f32 %v579, 0.0
    %v708 = vmax.f32 %v618, 0.0
    %v709 = vmax.f32 %v620, 0.0
    %v710 = vmax.f32 %v659, 0.0
    %v711 = vmax.f32 %v661, 0.0
    %v712 = vmax.f32 %v700, 0.0
    %v713 = vmax.f32 %v702, 0.0
    %v714 = vpack.c.bf16 %v706, %v706
    %v715 = vpack.c.bf16 %v707, %v707
    %v716 = vpack.c.bf16 %v708, %v708
    %v717 = vpack.c.bf16 %v709, %v709
    %v718 = vpack.c.bf16 %v710, %v710
    %v719 = vpack.c.bf16 %v711, %v711
    %v720 = vpack.c.bf16 %v712, %v712
    %v721 = vpack.c.bf16 %v713, %v713
    %v722 = vld [vmem:[#allocation8] sm:$0xff]
    %v723 = vld [vmem:[#allocation8 + $0x8] sm:$0xff]
    %v724 = vld [vmem:[#allocation8 + $0x10] sm:$0xff]
    %v725 = vld [vmem:[#allocation8 + $0x18] sm:$0xff]
    %v726 = vld [vmem:[#allocation8 + $0x20] sm:$0xff]
    %v727 = vld [vmem:[#allocation8 + $0x28] sm:$0xff]
    %v728 = vld [vmem:[#allocation8 + $0x30] sm:$0xff]
    %v729 = vld [vmem:[#allocation8 + $0x38] sm:$0xff]
    %v730 = vld [vmem:[#allocation8 + $0x40] sm:$0xff]
    %v731 = vld [vmem:[#allocation8 + $0x48] sm:$0xff]
    %v732 = vld [vmem:[#allocation8 + $0x50] sm:$0xff]
    %v733 = vld [vmem:[#allocation8 + $0x58] sm:$0xff]
    %v734 = vld [vmem:[#allocation8 + $0x60] sm:$0xff]
    %v735 = vld [vmem:[#allocation8 + $0x68] sm:$0xff]
    %v736 = vld [vmem:[#allocation8 + $0x70] sm:$0xff]
    %v737 = vld [vmem:[#allocation8 + $0x78] sm:$0xff]
    %v738 = vld [vmem:[#allocation8 + $0x80] sm:$0xff]
    %v739 = vld [vmem:[#allocation8 + $0x88] sm:$0xff]
    %v740 = vld [vmem:[#allocation8 + $0x90] sm:$0xff]
    %v741 = vld [vmem:[#allocation8 + $0x98] sm:$0xff]
    %v742 = vld [vmem:[#allocation8 + $0xa0] sm:$0xff]
    %v743 = vld [vmem:[#allocation8 + $0xa8] sm:$0xff]
    %v744 = vld [vmem:[#allocation8 + $0xb0] sm:$0xff]
    %v745 = vld [vmem:[#allocation8 + $0xb8] sm:$0xff]
    %v746 = vld [vmem:[#allocation8 + $0xc0] sm:$0xff]
    %v747 = vld [vmem:[#allocation8 + $0xc8] sm:$0xff]
    %v748 = vld [vmem:[#allocation8 + $0xd0] sm:$0xff]
    %v749 = vld [vmem:[#allocation8 + $0xd8] sm:$0xff]
    %v750 = vld [vmem:[#allocation8 + $0xe0] sm:$0xff]
    %v751 = vld [vmem:[#allocation8 + $0xe8] sm:$0xff]
    %v752 = vld [vmem:[#allocation8 + $0xf0] sm:$0xff]
    %v753 = vld [vmem:[#allocation8 + $0xf8] sm:$0xff]
    %v754 = vld [vmem:[#allocation8 + $0x100] sm:$0xff]
    %v755 = vld [vmem:[#allocation8 + $0x108] sm:$0xff]
    %v756 = vld [vmem:[#allocation8 + $0x110] sm:$0xff]
    %v757 = vld [vmem:[#allocation8 + $0x118] sm:$0xff]
    %v758 = vld [vmem:[#allocation8 + $0x120] sm:$0xff]
    %v759 = vld [vmem:[#allocation8 + $0x128] sm:$0xff]
    %v760 = vld [vmem:[#allocation8 + $0x130] sm:$0xff]
    %v761 = vld [vmem:[#allocation8 + $0x138] sm:$0xff]
    %v762 = vld [vmem:[#allocation8 + $0x140] sm:$0xff]
    %v763 = vld [vmem:[#allocation8 + $0x148] sm:$0xff]
    %v764 = vld [vmem:[#allocation8 + $0x150] sm:$0xff]
    %v765 = vld [vmem:[#allocation8 + $0x158] sm:$0xff]
    %v766 = vld [vmem:[#allocation8 + $0x160] sm:$0xff]
    %v767 = vld [vmem:[#allocation8 + $0x168] sm:$0xff]
    %v768 = vld [vmem:[#allocation8 + $0x170] sm:$0xff]
    %v769 = vld [vmem:[#allocation8 + $0x178] sm:$0xff]
    %v770 = vld [vmem:[#allocation8 + $0x180] sm:$0xff]
    %v771 = vld [vmem:[#allocation8 + $0x188] sm:$0xff]
    %v772 = vld [vmem:[#allocation8 + $0x190] sm:$0xff]
    %v773 = vld [vmem:[#allocation8 + $0x198] sm:$0xff]
    %v774 = vld [vmem:[#allocation8 + $0x1a0] sm:$0xff]
    %v775 = vld [vmem:[#allocation8 + $0x1a8] sm:$0xff]
    %v776 = vld [vmem:[#allocation8 + $0x1b0] sm:$0xff]
    %v777 = vld [vmem:[#allocation8 + $0x1b8] sm:$0xff]
    %v778 = vld [vmem:[#allocation8 + $0x1c0] sm:$0xff]
    %v779 = vld [vmem:[#allocation8 + $0x1c8] sm:$0xff]
    %v780 = vld [vmem:[#allocation8 + $0x1d0] sm:$0xff]
    %v781 = vld [vmem:[#allocation8 + $0x1d8] sm:$0xff]
    %v782 = vld [vmem:[#allocation8 + $0x1e0] sm:$0xff]
    %v783 = vld [vmem:[#allocation8 + $0x1e8] sm:$0xff]
    %v784 = vld [vmem:[#allocation8 + $0x1f0] sm:$0xff]
    %v785 = vld [vmem:[#allocation8 + $0x1f8] sm:$0xff]
    %v786 = vld [vmem:[#allocation8 + $0x200] sm:$0xff]
    %v787 = vld [vmem:[#allocation8 + $0x208] sm:$0xff]
    %v788 = vld [vmem:[#allocation8 + $0x210] sm:$0xff]
    %v789 = vld [vmem:[#allocation8 + $0x218] sm:$0xff]
    %v790 = vld [vmem:[#allocation8 + $0x220] sm:$0xff]
    %v791 = vld [vmem:[#allocation8 + $0x228] sm:$0xff]
    %v792 = vld [vmem:[#allocation8 + $0x230] sm:$0xff]
    %v793 = vld [vmem:[#allocation8 + $0x238] sm:$0xff]
    %v794 = vld [vmem:[#allocation8 + $0x240] sm:$0xff]
    %v795 = vld [vmem:[#allocation8 + $0x248] sm:$0xff]
    %v796 = vld [vmem:[#allocation8 + $0x250] sm:$0xff]
    %v797 = vld [vmem:[#allocation8 + $0x258] sm:$0xff]
    %v798 = vld [vmem:[#allocation8 + $0x260] sm:$0xff]
    %v799 = vld [vmem:[#allocation8 + $0x268] sm:$0xff]
    %v800 = vld [vmem:[#allocation8 + $0x270] sm:$0xff]
    %v801 = vld [vmem:[#allocation8 + $0x278] sm:$0xff]
    %v802 = vld [vmem:[#allocation8 + $0x280] sm:$0xff]
    %v803 = vld [vmem:[#allocation8 + $0x288] sm:$0xff]
    %v804 = vld [vmem:[#allocation8 + $0x290] sm:$0xff]
    %v805 = vld [vmem:[#allocation8 + $0x298] sm:$0xff]
    %v806 = vld [vmem:[#allocation8 + $0x2a0] sm:$0xff]
    %v807 = vld [vmem:[#allocation8 + $0x2a8] sm:$0xff]
    %v808 = vld [vmem:[#allocation8 + $0x2b0] sm:$0xff]
    %v809 = vld [vmem:[#allocation8 + $0x2b8] sm:$0xff]
    %v810 = vld [vmem:[#allocation8 + $0x2c0] sm:$0xff]
    %v811 = vld [vmem:[#allocation8 + $0x2c8] sm:$0xff]
    %v812 = vld [vmem:[#allocation8 + $0x2d0] sm:$0xff]
    %v813 = vld [vmem:[#allocation8 + $0x2d8] sm:$0xff]
    %v814 = vld [vmem:[#allocation8 + $0x2e0] sm:$0xff]
    %v815 = vld [vmem:[#allocation8 + $0x2e8] sm:$0xff]
    %v816 = vld [vmem:[#allocation8 + $0x2f0] sm:$0xff]
    %v817 = vld [vmem:[#allocation8 + $0x2f8] sm:$0xff]
    %v818 = vld [vmem:[#allocation8 + $0x300] sm:$0xff]
    %v819 = vld [vmem:[#allocation8 + $0x308] sm:$0xff]
    %v820 = vld [vmem:[#allocation8 + $0x310] sm:$0xff]
    %v821 = vld [vmem:[#allocation8 + $0x318] sm:$0xff]
    %v822 = vld [vmem:[#allocation8 + $0x320] sm:$0xff]
    %v823 = vld [vmem:[#allocation8 + $0x328] sm:$0xff]
    %v824 = vld [vmem:[#allocation8 + $0x330] sm:$0xff]
    %v825 = vld [vmem:[#allocation8 + $0x338] sm:$0xff]
    %v826 = vld [vmem:[#allocation8 + $0x340] sm:$0xff]
    %v827 = vld [vmem:[#allocation8 + $0x348] sm:$0xff]
    %v828 = vld [vmem:[#allocation8 + $0x350] sm:$0xff]
    %v829 = vld [vmem:[#allocation8 + $0x358] sm:$0xff]
    %v830 = vld [vmem:[#allocation8 + $0x360] sm:$0xff]
    %v831 = vld [vmem:[#allocation8 + $0x368] sm:$0xff]
    %v832 = vld [vmem:[#allocation8 + $0x370] sm:$0xff]
    %v833 = vld [vmem:[#allocation8 + $0x378] sm:$0xff]
    %v834 = vld [vmem:[#allocation8 + $0x380] sm:$0xff]
    %v835 = vld [vmem:[#allocation8 + $0x388] sm:$0xff]
    %v836 = vld [vmem:[#allocation8 + $0x390] sm:$0xff]
    %v837 = vld [vmem:[#allocation8 + $0x398] sm:$0xff]
    %v838 = vld [vmem:[#allocation8 + $0x3a0] sm:$0xff]
    %v839 = vld [vmem:[#allocation8 + $0x3a8] sm:$0xff]
    %v840 = vld [vmem:[#allocation8 + $0x3b0] sm:$0xff]
    %v841 = vld [vmem:[#allocation8 + $0x3b8] sm:$0xff]
    %v842 = vld [vmem:[#allocation8 + $0x3c0] sm:$0xff]
    %v843 = vld [vmem:[#allocation8 + $0x3c8] sm:$0xff]
    %v844 = vld [vmem:[#allocation8 + $0x3d0] sm:$0xff]
    %v845 = vld [vmem:[#allocation8 + $0x3d8] sm:$0xff]
    %v846 = vld [vmem:[#allocation8 + $0x3e0] sm:$0xff]
    %v847 = vld [vmem:[#allocation8 + $0x3e8] sm:$0xff]
    %v848 = vld [vmem:[#allocation8 + $0x3f0] sm:$0xff]
    %v849 = vld [vmem:[#allocation8 + $0x3f8] sm:$0xff]
    %v850 = vld [vmem:[#allocation8 + $0x400] sm:$0xff]
    %v851 = vld [vmem:[#allocation8 + $0x408] sm:$0xff]
    %v852 = vld [vmem:[#allocation8 + $0x410] sm:$0xff]
    %v853 = vld [vmem:[#allocation8 + $0x418] sm:$0xff]
    %v854 = vld [vmem:[#allocation8 + $0x420] sm:$0xff]
    %v855 = vld [vmem:[#allocation8 + $0x428] sm:$0xff]
    %v856 = vld [vmem:[#allocation8 + $0x430] sm:$0xff]
    %v857 = vld [vmem:[#allocation8 + $0x438] sm:$0xff]
    %v858 = vld [vmem:[#allocation8 + $0x440] sm:$0xff]
    %v859 = vld [vmem:[#allocation8 + $0x448] sm:$0xff]
    %v860 = vld [vmem:[#allocation8 + $0x450] sm:$0xff]
    %v861 = vld [vmem:[#allocation8 + $0x458] sm:$0xff]
    %v862 = vld [vmem:[#allocation8 + $0x460] sm:$0xff]
    %v863 = vld [vmem:[#allocation8 + $0x468] sm:$0xff]
    %v864 = vld [vmem:[#allocation8 + $0x470] sm:$0xff]
    %v865 = vld [vmem:[#allocation8 + $0x478] sm:$0xff]
    %v866 = vld [vmem:[#allocation8 + $0x480] sm:$0xff]
    %v867 = vld [vmem:[#allocation8 + $0x488] sm:$0xff]
    %v868 = vld [vmem:[#allocation8 + $0x490] sm:$0xff]
    %v869 = vld [vmem:[#allocation8 + $0x498] sm:$0xff]
    %v870 = vld [vmem:[#allocation8 + $0x4a0] sm:$0xff]
    %v871 = vld [vmem:[#allocation8 + $0x4a8] sm:$0xff]
    %v872 = vld [vmem:[#allocation8 + $0x4b0] sm:$0xff]
    %v873 = vld [vmem:[#allocation8 + $0x4b8] sm:$0xff]
    %v874 = vld [vmem:[#allocation8 + $0x4c0] sm:$0xff]
    %v875 = vld [vmem:[#allocation8 + $0x4c8] sm:$0xff]
    %v876 = vld [vmem:[#allocation8 + $0x4d0] sm:$0xff]
    %v877 = vld [vmem:[#allocation8 + $0x4d8] sm:$0xff]
    %v878 = vld [vmem:[#allocation8 + $0x4e0] sm:$0xff]
    %v879 = vld [vmem:[#allocation8 + $0x4e8] sm:$0xff]
    %v880 = vld [vmem:[#allocation8 + $0x4f0] sm:$0xff]
    %v881 = vld [vmem:[#allocation8 + $0x4f8] sm:$0xff]
    %v882 = vld [vmem:[#allocation8 + $0x500] sm:$0xff]
    %v883 = vld [vmem:[#allocation8 + $0x508] sm:$0xff]
    %v884 = vld [vmem:[#allocation8 + $0x510] sm:$0xff]
    %v885 = vld [vmem:[#allocation8 + $0x518] sm:$0xff]
    %v886 = vld [vmem:[#allocation8 + $0x520] sm:$0xff]
    %v887 = vld [vmem:[#allocation8 + $0x528] sm:$0xff]
    %v888 = vld [vmem:[#allocation8 + $0x530] sm:$0xff]
    %v889 = vld [vmem:[#allocation8 + $0x538] sm:$0xff]
    %v890 = vld [vmem:[#allocation8 + $0x540] sm:$0xff]
    %v891 = vld [vmem:[#allocation8 + $0x548] sm:$0xff]
    %v892 = vld [vmem:[#allocation8 + $0x550] sm:$0xff]
    %v893 = vld [vmem:[#allocation8 + $0x558] sm:$0xff]
    %v894 = vld [vmem:[#allocation8 + $0x560] sm:$0xff]
    %v895 = vld [vmem:[#allocation8 + $0x568] sm:$0xff]
    %v896 = vld [vmem:[#allocation8 + $0x570] sm:$0xff]
    %v897 = vld [vmem:[#allocation8 + $0x578] sm:$0xff]
    %v898 = vld [vmem:[#allocation8 + $0x580] sm:$0xff]
    %v899 = vld [vmem:[#allocation8 + $0x588] sm:$0xff]
    %v900 = vld [vmem:[#allocation8 + $0x590] sm:$0xff]
    %v901 = vld [vmem:[#allocation8 + $0x598] sm:$0xff]
    %v902 = vld [vmem:[#allocation8 + $0x5a0] sm:$0xff]
    %v903 = vld [vmem:[#allocation8 + $0x5a8] sm:$0xff]
    %v904 = vld [vmem:[#allocation8 + $0x5b0] sm:$0xff]
    %v905 = vld [vmem:[#allocation8 + $0x5b8] sm:$0xff]
    %v906 = vld [vmem:[#allocation8 + $0x5c0] sm:$0xff]
    %v907 = vld [vmem:[#allocation8 + $0x5c8] sm:$0xff]
    %v908 = vld [vmem:[#allocation8 + $0x5d0] sm:$0xff]
    %v909 = vld [vmem:[#allocation8 + $0x5d8] sm:$0xff]
    %v910 = vld [vmem:[#allocation8 + $0x5e0] sm:$0xff]
    %v911 = vld [vmem:[#allocation8 + $0x5e8] sm:$0xff]
    %v912 = vld [vmem:[#allocation8 + $0x5f0] sm:$0xff]
    %v913 = vld [vmem:[#allocation8 + $0x5f8] sm:$0xff]
    %v914 = vld [vmem:[#allocation8 + $0x600] sm:$0xff]
    %v915 = vld [vmem:[#allocation8 + $0x608] sm:$0xff]
    %v916 = vld [vmem:[#allocation8 + $0x610] sm:$0xff]
    %v917 = vld [vmem:[#allocation8 + $0x618] sm:$0xff]
    %v918 = vld [vmem:[#allocation8 + $0x620] sm:$0xff]
    %v919 = vld [vmem:[#allocation8 + $0x628] sm:$0xff]
    %v920 = vld [vmem:[#allocation8 + $0x630] sm:$0xff]
    %v921 = vld [vmem:[#allocation8 + $0x638] sm:$0xff]
    %v922 = vld [vmem:[#allocation8 + $0x640] sm:$0xff]
    %v923 = vld [vmem:[#allocation8 + $0x648] sm:$0xff]
    %v924 = vld [vmem:[#allocation8 + $0x650] sm:$0xff]
    %v925 = vld [vmem:[#allocation8 + $0x658] sm:$0xff]
    %v926 = vld [vmem:[#allocation8 + $0x660] sm:$0xff]
    %v927 = vld [vmem:[#allocation8 + $0x668] sm:$0xff]
    %v928 = vld [vmem:[#allocation8 + $0x670] sm:$0xff]
    %v929 = vld [vmem:[#allocation8 + $0x678] sm:$0xff]
    %v930 = vld [vmem:[#allocation8 + $0x680] sm:$0xff]
    %v931 = vld [vmem:[#allocation8 + $0x688] sm:$0xff]
    %v932 = vld [vmem:[#allocation8 + $0x690] sm:$0xff]
    %v933 = vld [vmem:[#allocation8 + $0x698] sm:$0xff]
    %v934 = vld [vmem:[#allocation8 + $0x6a0] sm:$0xff]
    %v935 = vld [vmem:[#allocation8 + $0x6a8] sm:$0xff]
    %v936 = vld [vmem:[#allocation8 + $0x6b0] sm:$0xff]
    %v937 = vld [vmem:[#allocation8 + $0x6b8] sm:$0xff]
    %v938 = vld [vmem:[#allocation8 + $0x6c0] sm:$0xff]
    %v939 = vld [vmem:[#allocation8 + $0x6c8] sm:$0xff]
    %v940 = vld [vmem:[#allocation8 + $0x6d0] sm:$0xff]
    %v941 = vld [vmem:[#allocation8 + $0x6d8] sm:$0xff]
    %v942 = vld [vmem:[#allocation8 + $0x6e0] sm:$0xff]
    %v943 = vld [vmem:[#allocation8 + $0x6e8] sm:$0xff]
    %v944 = vld [vmem:[#allocation8 + $0x6f0] sm:$0xff]
    %v945 = vld [vmem:[#allocation8 + $0x6f8] sm:$0xff]
    %v946 = vld [vmem:[#allocation8 + $0x700] sm:$0xff]
    %v947 = vld [vmem:[#allocation8 + $0x708] sm:$0xff]
    %v948 = vld [vmem:[#allocation8 + $0x710] sm:$0xff]
    %v949 = vld [vmem:[#allocation8 + $0x718] sm:$0xff]
    %v950 = vld [vmem:[#allocation8 + $0x720] sm:$0xff]
    %v951 = vld [vmem:[#allocation8 + $0x728] sm:$0xff]
    %v952 = vld [vmem:[#allocation8 + $0x730] sm:$0xff]
    %v953 = vld [vmem:[#allocation8 + $0x738] sm:$0xff]
    %v954 = vld [vmem:[#allocation8 + $0x740] sm:$0xff]
    %v955 = vld [vmem:[#allocation8 + $0x748] sm:$0xff]
    %v956 = vld [vmem:[#allocation8 + $0x750] sm:$0xff]
    %v957 = vld [vmem:[#allocation8 + $0x758] sm:$0xff]
    %v958 = vld [vmem:[#allocation8 + $0x760] sm:$0xff]
    %v959 = vld [vmem:[#allocation8 + $0x768] sm:$0xff]
    %v960 = vld [vmem:[#allocation8 + $0x770] sm:$0xff]
    %v961 = vld [vmem:[#allocation8 + $0x778] sm:$0xff]
    %v962 = vld [vmem:[#allocation8 + $0x780] sm:$0xff]
    %v963 = vld [vmem:[#allocation8 + $0x788] sm:$0xff]
    %v964 = vld [vmem:[#allocation8 + $0x790] sm:$0xff]
    %v965 = vld [vmem:[#allocation8 + $0x798] sm:$0xff]
    %v966 = vld [vmem:[#allocation8 + $0x7a0] sm:$0xff]
    %v967 = vld [vmem:[#allocation8 + $0x7a8] sm:$0xff]
    %v968 = vld [vmem:[#allocation8 + $0x7b0] sm:$0xff]
    %v969 = vld [vmem:[#allocation8 + $0x7b8] sm:$0xff]
    %v970 = vld [vmem:[#allocation8 + $0x7c0] sm:$0xff]
    %v971 = vld [vmem:[#allocation8 + $0x7c8] sm:$0xff]
    %v972 = vld [vmem:[#allocation8 + $0x7d0] sm:$0xff]
    %v973 = vld [vmem:[#allocation8 + $0x7d8] sm:$0xff]
    %v974 = vld [vmem:[#allocation8 + $0x7e0] sm:$0xff]
    %v975 = vld [vmem:[#allocation8 + $0x7e8] sm:$0xff]
    %v976 = vld [vmem:[#allocation8 + $0x7f0] sm:$0xff]
    %v977 = vld [vmem:[#allocation8 + $0x7f8] sm:$0xff]
    %v978 = vld [vmem:[%s4] sm:$0xf]
    %v980 = vlaneseq
    %v981 = vshrl.u32 %v980, 7
    %v982 = vsub.s32 0, %v981
    %v983 = vrot.slane %v978, %v982
    %v984 = vlaneseq
    %v985 = vshrl.u32 %v984, 7
    %v986 = vsub.s32 1, %v985
    %v987 = vrot.slane %v978, %v986
    %v988 = vlaneseq
    %v989 = vshrl.u32 %v988, 7
    %v990 = vsub.s32 2, %v989
    %v991 = vrot.slane %v978, %v990
    %v992 = vlaneseq
    %v993 = vshrl.u32 %v992, 7
    %v994 = vsub.s32 3, %v993
    %v995 = vrot.slane %v978, %v994
    %v1256 = vunpack.c.l.b16 %v722
    %v1257 = vunpack.c.h.b16 %v722
    %v1258 = vunpack.c.l.b16 %v723
    %v1259 = vunpack.c.h.b16 %v723
    %v1260 = vunpack.c.l.b16 %v724
    %v1261 = vunpack.c.h.b16 %v724
    %v1262 = vunpack.c.l.b16 %v725
    %v1263 = vunpack.c.h.b16 %v725
    %v1264 = vunpack.c.l.b16 %v726
    %v1265 = vunpack.c.h.b16 %v726
    %v1266 = vunpack.c.l.b16 %v727
    %v1267 = vunpack.c.h.b16 %v727
    %v1268 = vunpack.c.l.b16 %v728
    %v1269 = vunpack.c.h.b16 %v728
    %v1270 = vunpack.c.l.b16 %v729
    %v1271 = vunpack.c.h.b16 %v729
    %v1272 = vunpack.c.l.b16 %v730
    %v1273 = vunpack.c.h.b16 %v730
    %v1274 = vunpack.c.l.b16 %v731
    %v1275 = vunpack.c.h.b16 %v731
    %v1276 = vunpack.c.l.b16 %v732
    %v1277 = vunpack.c.h.b16 %v732
    %v1278 = vunpack.c.l.b16 %v733
    %v1279 = vunpack.c.h.b16 %v733
    %v1280 = vunpack.c.l.b16 %v734
    %v1281 = vunpack.c.h.b16 %v734
    %v1282 = vunpack.c.l.b16 %v735
    %v1283 = vunpack.c.h.b16 %v735
    %v1284 = vunpack.c.l.b16 %v736
    %v1285 = vunpack.c.h.b16 %v736
    %v1286 = vunpack.c.l.b16 %v737
    %v1287 = vunpack.c.h.b16 %v737
    %v1288 = vunpack.c.l.b16 %v738
    %v1289 = vunpack.c.h.b16 %v738
    %v1290 = vunpack.c.l.b16 %v739
    %v1291 = vunpack.c.h.b16 %v739
    %v1292 = vunpack.c.l.b16 %v740
    %v1293 = vunpack.c.h.b16 %v740
    %v1294 = vunpack.c.l.b16 %v741
    %v1295 = vunpack.c.h.b16 %v741
    %v1296 = vunpack.c.l.b16 %v742
    %v1297 = vunpack.c.h.b16 %v742
    %v1298 = vunpack.c.l.b16 %v743
    %v1299 = vunpack.c.h.b16 %v743
    %v1300 = vunpack.c.l.b16 %v744
    %v1301 = vunpack.c.h.b16 %v744
    %v1302 = vunpack.c.l.b16 %v745
    %v1303 = vunpack.c.h.b16 %v745
    %v1304 = vunpack.c.l.b16 %v746
    %v1305 = vunpack.c.h.b16 %v746
    %v1306 = vunpack.c.l.b16 %v747
    %v1307 = vunpack.c.h.b16 %v747
    %v1308 = vunpack.c.l.b16 %v748
    %v1309 = vunpack.c.h.b16 %v748
    %v1310 = vunpack.c.l.b16 %v749
    %v1311 = vunpack.c.h.b16 %v749
    %v1312 = vunpack.c.l.b16 %v750
    %v1313 = vunpack.c.h.b16 %v750
    %v1314 = vunpack.c.l.b16 %v751
    %v1315 = vunpack.c.h.b16 %v751
    %v1316 = vunpack.c.l.b16 %v752
    %v1317 = vunpack.c.h.b16 %v752
    %v1318 = vunpack.c.l.b16 %v753
    %v1319 = vunpack.c.h.b16 %v753
    %v1320 = vunpack.c.l.b16 %v754
    %v1321 = vunpack.c.h.b16 %v754
    %v1322 = vunpack.c.l.b16 %v755
    %v1323 = vunpack.c.h.b16 %v755
    %v1324 = vunpack.c.l.b16 %v756
    %v1325 = vunpack.c.h.b16 %v756
    %v1326 = vunpack.c.l.b16 %v757
    %v1327 = vunpack.c.h.b16 %v757
    %v1328 = vunpack.c.l.b16 %v758
    %v1329 = vunpack.c.h.b16 %v758
    %v1330 = vunpack.c.l.b16 %v759
    %v1331 = vunpack.c.h.b16 %v759
    %v1332 = vunpack.c.l.b16 %v760
    %v1333 = vunpack.c.h.b16 %v760
    %v1334 = vunpack.c.l.b16 %v761
    %v1335 = vunpack.c.h.b16 %v761
    %v1336 = vunpack.c.l.b16 %v762
    %v1337 = vunpack.c.h.b16 %v762
    %v1338 = vunpack.c.l.b16 %v763
    %v1339 = vunpack.c.h.b16 %v763
    %v1340 = vunpack.c.l.b16 %v764
    %v1341 = vunpack.c.h.b16 %v764
    %v1342 = vunpack.c.l.b16 %v765
    %v1343 = vunpack.c.h.b16 %v765
    %v1344 = vunpack.c.l.b16 %v766
    %v1345 = vunpack.c.h.b16 %v766
    %v1346 = vunpack.c.l.b16 %v767
    %v1347 = vunpack.c.h.b16 %v767
    %v1348 = vunpack.c.l.b16 %v768
    %v1349 = vunpack.c.h.b16 %v768
    %v1350 = vunpack.c.l.b16 %v769
    %v1351 = vunpack.c.h.b16 %v769
    %v1352 = vunpack.c.l.b16 %v770
    %v1353 = vunpack.c.h.b16 %v770
    %v1354 = vunpack.c.l.b16 %v771
    %v1355 = vunpack.c.h.b16 %v771
    %v1356 = vunpack.c.l.b16 %v772
    %v1357 = vunpack.c.h.b16 %v772
    %v1358 = vunpack.c.l.b16 %v773
    %v1359 = vunpack.c.h.b16 %v773
    %v1360 = vunpack.c.l.b16 %v774
    %v1361 = vunpack.c.h.b16 %v774
    %v1362 = vunpack.c.l.b16 %v775
    %v1363 = vunpack.c.h.b16 %v775
    %v1364 = vunpack.c.l.b16 %v776
    %v1365 = vunpack.c.h.b16 %v776
    %v1366 = vunpack.c.l.b16 %v777
    %v1367 = vunpack.c.h.b16 %v777
    %v1368 = vunpack.c.l.b16 %v778
    %v1369 = vunpack.c.h.b16 %v778
    %v1370 = vunpack.c.l.b16 %v779
    %v1371 = vunpack.c.h.b16 %v779
    %v1372 = vunpack.c.l.b16 %v780
    %v1373 = vunpack.c.h.b16 %v780
    %v1374 = vunpack.c.l.b16 %v781
    %v1375 = vunpack.c.h.b16 %v781
    %v1376 = vunpack.c.l.b16 %v782
    %v1377 = vunpack.c.h.b16 %v782
    %v1378 = vunpack.c.l.b16 %v783
    %v1379 = vunpack.c.h.b16 %v783
    %v1380 = vunpack.c.l.b16 %v784
    %v1381 = vunpack.c.h.b16 %v784
    %v1382 = vunpack.c.l.b16 %v785
    %v1383 = vunpack.c.h.b16 %v785
    %v1384 = vunpack.c.l.b16 %v786
    %v1385 = vunpack.c.h.b16 %v786
    %v1386 = vunpack.c.l.b16 %v787
    %v1387 = vunpack.c.h.b16 %v787
    %v1388 = vunpack.c.l.b16 %v788
    %v1389 = vunpack.c.h.b16 %v788
    %v1390 = vunpack.c.l.b16 %v789
    %v1391 = vunpack.c.h.b16 %v789
    %v1392 = vunpack.c.l.b16 %v790
    %v1393 = vunpack.c.h.b16 %v790
    %v1394 = vunpack.c.l.b16 %v791
    %v1395 = vunpack.c.h.b16 %v791
    %v1396 = vunpack.c.l.b16 %v792
    %v1397 = vunpack.c.h.b16 %v792
    %v1398 = vunpack.c.l.b16 %v793
    %v1399 = vunpack.c.h.b16 %v793
    %v1400 = vunpack.c.l.b16 %v794
    %v1401 = vunpack.c.h.b16 %v794
    %v1402 = vunpack.c.l.b16 %v795
    %v1403 = vunpack.c.h.b16 %v795
    %v1404 = vunpack.c.l.b16 %v796
    %v1405 = vunpack.c.h.b16 %v796
    %v1406 = vunpack.c.l.b16 %v797
    %v1407 = vunpack.c.h.b16 %v797
    %v1408 = vunpack.c.l.b16 %v798
    %v1409 = vunpack.c.h.b16 %v798
    %v1410 = vunpack.c.l.b16 %v799
    %v1411 = vunpack.c.h.b16 %v799
    %v1412 = vunpack.c.l.b16 %v800
    %v1413 = vunpack.c.h.b16 %v800
    %v1414 = vunpack.c.l.b16 %v801
    %v1415 = vunpack.c.h.b16 %v801
    %v1416 = vunpack.c.l.b16 %v802
    %v1417 = vunpack.c.h.b16 %v802
    %v1418 = vunpack.c.l.b16 %v803
    %v1419 = vunpack.c.h.b16 %v803
    %v1420 = vunpack.c.l.b16 %v804
    %v1421 = vunpack.c.h.b16 %v804
    %v1422 = vunpack.c.l.b16 %v805
    %v1423 = vunpack.c.h.b16 %v805
    %v1424 = vunpack.c.l.b16 %v806
    %v1425 = vunpack.c.h.b16 %v806
    %v1426 = vunpack.c.l.b16 %v807
    %v1427 = vunpack.c.h.b16 %v807
    %v1428 = vunpack.c.l.b16 %v808
    %v1429 = vunpack.c.h.b16 %v808
    %v1430 = vunpack.c.l.b16 %v809
    %v1431 = vunpack.c.h.b16 %v809
    %v1432 = vunpack.c.l.b16 %v810
    %v1433 = vunpack.c.h.b16 %v810
    %v1434 = vunpack.c.l.b16 %v811
    %v1435 = vunpack.c.h.b16 %v811
    %v1436 = vunpack.c.l.b16 %v812
    %v1437 = vunpack.c.h.b16 %v812
    %v1438 = vunpack.c.l.b16 %v813
    %v1439 = vunpack.c.h.b16 %v813
    %v1440 = vunpack.c.l.b16 %v814
    %v1441 = vunpack.c.h.b16 %v814
    %v1442 = vunpack.c.l.b16 %v815
    %v1443 = vunpack.c.h.b16 %v815
    %v1444 = vunpack.c.l.b16 %v816
    %v1445 = vunpack.c.h.b16 %v816
    %v1446 = vunpack.c.l.b16 %v817
    %v1447 = vunpack.c.h.b16 %v817
    %v1448 = vunpack.c.l.b16 %v818
    %v1449 = vunpack.c.h.b16 %v818
    %v1450 = vunpack.c.l.b16 %v819
    %v1451 = vunpack.c.h.b16 %v819
    %v1452 = vunpack.c.l.b16 %v820
    %v1453 = vunpack.c.h.b16 %v820
    %v1454 = vunpack.c.l.b16 %v821
    %v1455 = vunpack.c.h.b16 %v821
    %v1456 = vunpack.c.l.b16 %v822
    %v1457 = vunpack.c.h.b16 %v822
    %v1458 = vunpack.c.l.b16 %v823
    %v1459 = vunpack.c.h.b16 %v823
    %v1460 = vunpack.c.l.b16 %v824
    %v1461 = vunpack.c.h.b16 %v824
    %v1462 = vunpack.c.l.b16 %v825
    %v1463 = vunpack.c.h.b16 %v825
    %v1464 = vunpack.c.l.b16 %v826
    %v1465 = vunpack.c.h.b16 %v826
    %v1466 = vunpack.c.l.b16 %v827
    %v1467 = vunpack.c.h.b16 %v827
    %v1468 = vunpack.c.l.b16 %v828
    %v1469 = vunpack.c.h.b16 %v828
    %v1470 = vunpack.c.l.b16 %v829
    %v1471 = vunpack.c.h.b16 %v829
    %v1472 = vunpack.c.l.b16 %v830
    %v1473 = vunpack.c.h.b16 %v830
    %v1474 = vunpack.c.l.b16 %v831
    %v1475 = vunpack.c.h.b16 %v831
    %v1476 = vunpack.c.l.b16 %v832
    %v1477 = vunpack.c.h.b16 %v832
    %v1478 = vunpack.c.l.b16 %v833
    %v1479 = vunpack.c.h.b16 %v833
    %v1480 = vunpack.c.l.b16 %v834
    %v1481 = vunpack.c.h.b16 %v834
    %v1482 = vunpack.c.l.b16 %v835
    %v1483 = vunpack.c.h.b16 %v835
    %v1484 = vunpack.c.l.b16 %v836
    %v1485 = vunpack.c.h.b16 %v836
    %v1486 = vunpack.c.l.b16 %v837
    %v1487 = vunpack.c.h.b16 %v837
    %v1488 = vunpack.c.l.b16 %v838
    %v1489 = vunpack.c.h.b16 %v838
    %v1490 = vunpack.c.l.b16 %v839
    %v1491 = vunpack.c.h.b16 %v839
    %v1492 = vunpack.c.l.b16 %v840
    %v1493 = vunpack.c.h.b16 %v840
    %v1494 = vunpack.c.l.b16 %v841
    %v1495 = vunpack.c.h.b16 %v841
    %v1496 = vunpack.c.l.b16 %v842
    %v1497 = vunpack.c.h.b16 %v842
    %v1498 = vunpack.c.l.b16 %v843
    %v1499 = vunpack.c.h.b16 %v843
    %v1500 = vunpack.c.l.b16 %v844
    %v1501 = vunpack.c.h.b16 %v844
    %v1502 = vunpack.c.l.b16 %v845
    %v1503 = vunpack.c.h.b16 %v845
    %v1504 = vunpack.c.l.b16 %v846
    %v1505 = vunpack.c.h.b16 %v846
    %v1506 = vunpack.c.l.b16 %v847
    %v1507 = vunpack.c.h.b16 %v847
    %v1508 = vunpack.c.l.b16 %v848
    %v1509 = vunpack.c.h.b16 %v848
    %v1510 = vunpack.c.l.b16 %v849
    %v1511 = vunpack.c.h.b16 %v849
    %v1512 = vunpack.c.l.b16 %v850
    %v1513 = vunpack.c.h.b16 %v850
    %v1514 = vunpack.c.l.b16 %v851
    %v1515 = vunpack.c.h.b16 %v851
    %v1516 = vunpack.c.l.b16 %v852
    %v1517 = vunpack.c.h.b16 %v852
    %v1518 = vunpack.c.l.b16 %v853
    %v1519 = vunpack.c.h.b16 %v853
    %v1520 = vunpack.c.l.b16 %v854
    %v1521 = vunpack.c.h.b16 %v854
    %v1522 = vunpack.c.l.b16 %v855
    %v1523 = vunpack.c.h.b16 %v855
    %v1524 = vunpack.c.l.b16 %v856
    %v1525 = vunpack.c.h.b16 %v856
    %v1526 = vunpack.c.l.b16 %v857
    %v1527 = vunpack.c.h.b16 %v857
    %v1528 = vunpack.c.l.b16 %v858
    %v1529 = vunpack.c.h.b16 %v858
    %v1530 = vunpack.c.l.b16 %v859
    %v1531 = vunpack.c.h.b16 %v859
    %v1532 = vunpack.c.l.b16 %v860
    %v1533 = vunpack.c.h.b16 %v860
    %v1534 = vunpack.c.l.b16 %v861
    %v1535 = vunpack.c.h.b16 %v861
    %v1536 = vunpack.c.l.b16 %v862
    %v1537 = vunpack.c.h.b16 %v862
    %v1538 = vunpack.c.l.b16 %v863
    %v1539 = vunpack.c.h.b16 %v863
    %v1540 = vunpack.c.l.b16 %v864
    %v1541 = vunpack.c.h.b16 %v864
    %v1542 = vunpack.c.l.b16 %v865
    %v1543 = vunpack.c.h.b16 %v865
    %v1544 = vunpack.c.l.b16 %v866
    %v1545 = vunpack.c.h.b16 %v866
    %v1546 = vunpack.c.l.b16 %v867
    %v1547 = vunpack.c.h.b16 %v867
    %v1548 = vunpack.c.l.b16 %v868
    %v1549 = vunpack.c.h.b16 %v868
    %v1550 = vunpack.c.l.b16 %v869
    %v1551 = vunpack.c.h.b16 %v869
    %v1552 = vunpack.c.l.b16 %v870
    %v1553 = vunpack.c.h.b16 %v870
    %v1554 = vunpack.c.l.b16 %v871
    %v1555 = vunpack.c.h.b16 %v871
    %v1556 = vunpack.c.l.b16 %v872
    %v1557 = vunpack.c.h.b16 %v872
    %v1558 = vunpack.c.l.b16 %v873
    %v1559 = vunpack.c.h.b16 %v873
    %v1560 = vunpack.c.l.b16 %v874
    %v1561 = vunpack.c.h.b16 %v874
    %v1562 = vunpack.c.l.b16 %v875
    %v1563 = vunpack.c.h.b16 %v875
    %v1564 = vunpack.c.l.b16 %v876
    %v1565 = vunpack.c.h.b16 %v876
    %v1566 = vunpack.c.l.b16 %v877
    %v1567 = vunpack.c.h.b16 %v877
    %v1568 = vunpack.c.l.b16 %v878
    %v1569 = vunpack.c.h.b16 %v878
    %v1570 = vunpack.c.l.b16 %v879
    %v1571 = vunpack.c.h.b16 %v879
    %v1572 = vunpack.c.l.b16 %v880
    %v1573 = vunpack.c.h.b16 %v880
    %v1574 = vunpack.c.l.b16 %v881
    %v1575 = vunpack.c.h.b16 %v881
    %v1576 = vunpack.c.l.b16 %v882
    %v1577 = vunpack.c.h.b16 %v882
    %v1578 = vunpack.c.l.b16 %v883
    %v1579 = vunpack.c.h.b16 %v883
    %v1580 = vunpack.c.l.b16 %v884
    %v1581 = vunpack.c.h.b16 %v884
    %v1582 = vunpack.c.l.b16 %v885
    %v1583 = vunpack.c.h.b16 %v885
    %v1584 = vunpack.c.l.b16 %v886
    %v1585 = vunpack.c.h.b16 %v886
    %v1586 = vunpack.c.l.b16 %v887
    %v1587 = vunpack.c.h.b16 %v887
    %v1588 = vunpack.c.l.b16 %v888
    %v1589 = vunpack.c.h.b16 %v888
    %v1590 = vunpack.c.l.b16 %v889
    %v1591 = vunpack.c.h.b16 %v889
    %v1592 = vunpack.c.l.b16 %v890
    %v1593 = vunpack.c.h.b16 %v890
    %v1594 = vunpack.c.l.b16 %v891
    %v1595 = vunpack.c.h.b16 %v891
    %v1596 = vunpack.c.l.b16 %v892
    %v1597 = vunpack.c.h.b16 %v892
    %v1598 = vunpack.c.l.b16 %v893
    %v1599 = vunpack.c.h.b16 %v893
    %v1600 = vunpack.c.l.b16 %v894
    %v1601 = vunpack.c.h.b16 %v894
    %v1602 = vunpack.c.l.b16 %v895
    %v1603 = vunpack.c.h.b16 %v895
    %v1604 = vunpack.c.l.b16 %v896
    %v1605 = vunpack.c.h.b16 %v896
    %v1606 = vunpack.c.l.b16 %v897
    %v1607 = vunpack.c.h.b16 %v897
    %v1608 = vunpack.c.l.b16 %v898
    %v1609 = vunpack.c.h.b16 %v898
    %v1610 = vunpack.c.l.b16 %v899
    %v1611 = vunpack.c.h.b16 %v899
    %v1612 = vunpack.c.l.b16 %v900
    %v1613 = vunpack.c.h.b16 %v900
    %v1614 = vunpack.c.l.b16 %v901
    %v1615 = vunpack.c.h.b16 %v901
    %v1616 = vunpack.c.l.b16 %v902
    %v1617 = vunpack.c.h.b16 %v902
    %v1618 = vunpack.c.l.b16 %v903
    %v1619 = vunpack.c.h.b16 %v903
    %v1620 = vunpack.c.l.b16 %v904
    %v1621 = vunpack.c.h.b16 %v904
    %v1622 = vunpack.c.l.b16 %v905
    %v1623 = vunpack.c.h.b16 %v905
    %v1624 = vunpack.c.l.b16 %v906
    %v1625 = vunpack.c.h.b16 %v906
    %v1626 = vunpack.c.l.b16 %v907
    %v1627 = vunpack.c.h.b16 %v907
    %v1628 = vunpack.c.l.b16 %v908
    %v1629 = vunpack.c.h.b16 %v908
    %v1630 = vunpack.c.l.b16 %v909
    %v1631 = vunpack.c.h.b16 %v909
    %v1632 = vunpack.c.l.b16 %v910
    %v1633 = vunpack.c.h.b16 %v910
    %v1634 = vunpack.c.l.b16 %v911
    %v1635 = vunpack.c.h.b16 %v911
    %v1636 = vunpack.c.l.b16 %v912
    %v1637 = vunpack.c.h.b16 %v912
    %v1638 = vunpack.c.l.b16 %v913
    %v1639 = vunpack.c.h.b16 %v913
    %v1640 = vunpack.c.l.b16 %v914
    %v1641 = vunpack.c.h.b16 %v914
    %v1642 = vunpack.c.l.b16 %v915
    %v1643 = vunpack.c.h.b16 %v915
    %v1644 = vunpack.c.l.b16 %v916
    %v1645 = vunpack.c.h.b16 %v916
    %v1646 = vunpack.c.l.b16 %v917
    %v1647 = vunpack.c.h.b16 %v917
    %v1648 = vunpack.c.l.b16 %v918
    %v1649 = vunpack.c.h.b16 %v918
    %v1650 = vunpack.c.l.b16 %v919
    %v1651 = vunpack.c.h.b16 %v919
    %v1652 = vunpack.c.l.b16 %v920
    %v1653 = vunpack.c.h.b16 %v920
    %v1654 = vunpack.c.l.b16 %v921
    %v1655 = vunpack.c.h.b16 %v921
    %v1656 = vunpack.c.l.b16 %v922
    %v1657 = vunpack.c.h.b16 %v922
    %v1658 = vunpack.c.l.b16 %v923
    %v1659 = vunpack.c.h.b16 %v923
    %v1660 = vunpack.c.l.b16 %v924
    %v1661 = vunpack.c.h.b16 %v924
    %v1662 = vunpack.c.l.b16 %v925
    %v1663 = vunpack.c.h.b16 %v925
    %v1664 = vunpack.c.l.b16 %v926
    %v1665 = vunpack.c.h.b16 %v926
    %v1666 = vunpack.c.l.b16 %v927
    %v1667 = vunpack.c.h.b16 %v927
    %v1668 = vunpack.c.l.b16 %v928
    %v1669 = vunpack.c.h.b16 %v928
    %v1670 = vunpack.c.l.b16 %v929
    %v1671 = vunpack.c.h.b16 %v929
    %v1672 = vunpack.c.l.b16 %v930
    %v1673 = vunpack.c.h.b16 %v930
    %v1674 = vunpack.c.l.b16 %v931
    %v1675 = vunpack.c.h.b16 %v931
    %v1676 = vunpack.c.l.b16 %v932
    %v1677 = vunpack.c.h.b16 %v932
    %v1678 = vunpack.c.l.b16 %v933
    %v1679 = vunpack.c.h.b16 %v933
    %v1680 = vunpack.c.l.b16 %v934
    %v1681 = vunpack.c.h.b16 %v934
    %v1682 = vunpack.c.l.b16 %v935
    %v1683 = vunpack.c.h.b16 %v935
    %v1684 = vunpack.c.l.b16 %v936
    %v1685 = vunpack.c.h.b16 %v936
    %v1686 = vunpack.c.l.b16 %v937
    %v1687 = vunpack.c.h.b16 %v937
    %v1688 = vunpack.c.l.b16 %v938
    %v1689 = vunpack.c.h.b16 %v938
    %v1690 = vunpack.c.l.b16 %v939
    %v1691 = vunpack.c.h.b16 %v939
    %v1692 = vunpack.c.l.b16 %v940
    %v1693 = vunpack.c.h.b16 %v940
    %v1694 = vunpack.c.l.b16 %v941
    %v1695 = vunpack.c.h.b16 %v941
    %v1696 = vunpack.c.l.b16 %v942
    %v1697 = vunpack.c.h.b16 %v942
    %v1698 = vunpack.c.l.b16 %v943
    %v1699 = vunpack.c.h.b16 %v943
    %v1700 = vunpack.c.l.b16 %v944
    %v1701 = vunpack.c.h.b16 %v944
    %v1702 = vunpack.c.l.b16 %v945
    %v1703 = vunpack.c.h.b16 %v945
    %v1704 = vunpack.c.l.b16 %v946
    %v1705 = vunpack.c.h.b16 %v946
    %v1706 = vunpack.c.l.b16 %v947
    %v1707 = vunpack.c.h.b16 %v947
    %v1708 = vunpack.c.l.b16 %v948
    %v1709 = vunpack.c.h.b16 %v948
    %v1710 = vunpack.c.l.b16 %v949
    %v1711 = vunpack.c.h.b16 %v949
    %v1712 = vunpack.c.l.b16 %v950
    %v1713 = vunpack.c.h.b16 %v950
    %v1714 = vunpack.c.l.b16 %v951
    %v1715 = vunpack.c.h.b16 %v951
    %v1716 = vunpack.c.l.b16 %v952
    %v1717 = vunpack.c.h.b16 %v952
    %v1718 = vunpack.c.l.b16 %v953
    %v1719 = vunpack.c.h.b16 %v953
    %v1720 = vunpack.c.l.b16 %v954
    %v1721 = vunpack.c.h.b16 %v954
    %v1722 = vunpack.c.l.b16 %v955
    %v1723 = vunpack.c.h.b16 %v955
    %v1724 = vunpack.c.l.b16 %v956
    %v1725 = vunpack.c.h.b16 %v956
    %v1726 = vunpack.c.l.b16 %v957
    %v1727 = vunpack.c.h.b16 %v957
    %v1728 = vunpack.c.l.b16 %v958
    %v1729 = vunpack.c.h.b16 %v958
    %v1730 = vunpack.c.l.b16 %v959
    %v1731 = vunpack.c.h.b16 %v959
    %v1732 = vunpack.c.l.b16 %v960
    %v1733 = vunpack.c.h.b16 %v960
    %v1734 = vunpack.c.l.b16 %v961
    %v1735 = vunpack.c.h.b16 %v961
    %v1736 = vunpack.c.l.b16 %v962
    %v1737 = vunpack.c.h.b16 %v962
    %v1738 = vunpack.c.l.b16 %v963
    %v1739 = vunpack.c.h.b16 %v963
    %v1740 = vunpack.c.l.b16 %v964
    %v1741 = vunpack.c.h.b16 %v964
    %v1742 = vunpack.c.l.b16 %v965
    %v1743 = vunpack.c.h.b16 %v965
    %v1744 = vunpack.c.l.b16 %v966
    %v1745 = vunpack.c.h.b16 %v966
    %v1746 = vunpack.c.l.b16 %v967
    %v1747 = vunpack.c.h.b16 %v967
    %v1748 = vunpack.c.l.b16 %v968
    %v1749 = vunpack.c.h.b16 %v968
    %v1750 = vunpack.c.l.b16 %v969
    %v1751 = vunpack.c.h.b16 %v969
    %v1752 = vunpack.c.l.b16 %v970
    %v1753 = vunpack.c.h.b16 %v970
    %v1754 = vunpack.c.l.b16 %v971
    %v1755 = vunpack.c.h.b16 %v971
    %v1756 = vunpack.c.l.b16 %v972
    %v1757 = vunpack.c.h.b16 %v972
    %v1758 = vunpack.c.l.b16 %v973
    %v1759 = vunpack.c.h.b16 %v973
    %v1760 = vunpack.c.l.b16 %v974
    %v1761 = vunpack.c.h.b16 %v974
    %v1762 = vunpack.c.l.b16 %v975
    %v1763 = vunpack.c.h.b16 %v975
    %v1764 = vunpack.c.l.b16 %v976
    %v1765 = vunpack.c.h.b16 %v976
    %v1766 = vunpack.c.l.b16 %v977
    %v1767 = vunpack.c.h.b16 %v977
    %v1768 = vpack.c.b16 %v1260, %v1256
    %v1769 = vpack.c.b16 %v1261, %v1257
    %v1770 = vpack.c.b16 %v1262, %v1258
    %v1771 = vpack.c.b16 %v1263, %v1259
    %v1772 = vpack.c.b16 %v1268, %v1264
    %v1773 = vpack.c.b16 %v1269, %v1265
    %v1774 = vpack.c.b16 %v1270, %v1266
    %v1775 = vpack.c.b16 %v1271, %v1267
    %v1776 = vpack.c.b16 %v1276, %v1272
    %v1777 = vpack.c.b16 %v1277, %v1273
    %v1778 = vpack.c.b16 %v1278, %v1274
    %v1779 = vpack.c.b16 %v1279, %v1275
    %v1780 = vpack.c.b16 %v1284, %v1280
    %v1781 = vpack.c.b16 %v1285, %v1281
    %v1782 = vpack.c.b16 %v1286, %v1282
    %v1783 = vpack.c.b16 %v1287, %v1283
    %v1784 = vpack.c.b16 %v1292, %v1288
    %v1785 = vpack.c.b16 %v1293, %v1289
    %v1786 = vpack.c.b16 %v1294, %v1290
    %v1787 = vpack.c.b16 %v1295, %v1291
    %v1788 = vpack.c.b16 %v1300, %v1296
    %v1789 = vpack.c.b16 %v1301, %v1297
    %v1790 = vpack.c.b16 %v1302, %v1298
    %v1791 = vpack.c.b16 %v1303, %v1299
    %v1792 = vpack.c.b16 %v1308, %v1304
    %v1793 = vpack.c.b16 %v1309, %v1305
    %v1794 = vpack.c.b16 %v1310, %v1306
    %v1795 = vpack.c.b16 %v1311, %v1307
    %v1796 = vpack.c.b16 %v1316, %v1312
    %v1797 = vpack.c.b16 %v1317, %v1313
    %v1798 = vpack.c.b16 %v1318, %v1314
    %v1799 = vpack.c.b16 %v1319, %v1315
    %v1800 = vpack.c.b16 %v1324, %v1320
    %v1801 = vpack.c.b16 %v1325, %v1321
    %v1802 = vpack.c.b16 %v1326, %v1322
    %v1803 = vpack.c.b16 %v1327, %v1323
    %v1804 = vpack.c.b16 %v1332, %v1328
    %v1805 = vpack.c.b16 %v1333, %v1329
    %v1806 = vpack.c.b16 %v1334, %v1330
    %v1807 = vpack.c.b16 %v1335, %v1331
    %v1808 = vpack.c.b16 %v1340, %v1336
    %v1809 = vpack.c.b16 %v1341, %v1337
    %v1810 = vpack.c.b16 %v1342, %v1338
    %v1811 = vpack.c.b16 %v1343, %v1339
    %v1812 = vpack.c.b16 %v1348, %v1344
    %v1813 = vpack.c.b16 %v1349, %v1345
    %v1814 = vpack.c.b16 %v1350, %v1346
    %v1815 = vpack.c.b16 %v1351, %v1347
    %v1816 = vpack.c.b16 %v1356, %v1352
    %v1817 = vpack.c.b16 %v1357, %v1353
    %v1818 = vpack.c.b16 %v1358, %v1354
    %v1819 = vpack.c.b16 %v1359, %v1355
    %v1820 = vpack.c.b16 %v1364, %v1360
    %v1821 = vpack.c.b16 %v1365, %v1361
    %v1822 = vpack.c.b16 %v1366, %v1362
    %v1823 = vpack.c.b16 %v1367, %v1363
    %v1824 = vpack.c.b16 %v1372, %v1368
    %v1825 = vpack.c.b16 %v1373, %v1369
    %v1826 = vpack.c.b16 %v1374, %v1370
    %v1827 = vpack.c.b16 %v1375, %v1371
    %v1828 = vpack.c.b16 %v1380, %v1376
    %v1829 = vpack.c.b16 %v1381, %v1377
    %v1830 = vpack.c.b16 %v1382, %v1378
    %v1831 = vpack.c.b16 %v1383, %v1379
    %v1832 = vpack.c.b16 %v1388, %v1384
    %v1833 = vpack.c.b16 %v1389, %v1385
    %v1834 = vpack.c.b16 %v1390, %v1386
    %v1835 = vpack.c.b16 %v1391, %v1387
    %v1836 = vpack.c.b16 %v1396, %v1392
    %v1837 = vpack.c.b16 %v1397, %v1393
    %v1838 = vpack.c.b16 %v1398, %v1394
    %v1839 = vpack.c.b16 %v1399, %v1395
    %v1840 = vpack.c.b16 %v1404, %v1400
    %v1841 = vpack.c.b16 %v1405, %v1401
    %v1842 = vpack.c.b16 %v1406, %v1402
    %v1843 = vpack.c.b16 %v1407, %v1403
    %v1844 = vpack.c.b16 %v1412, %v1408
    %v1845 = vpack.c.b16 %v1413, %v1409
    %v1846 = vpack.c.b16 %v1414, %v1410
    %v1847 = vpack.c.b16 %v1415, %v1411
    %v1848 = vpack.c.b16 %v1420, %v1416
    %v1849 = vpack.c.b16 %v1421, %v1417
    %v1850 = vpack.c.b16 %v1422, %v1418
    %v1851 = vpack.c.b16 %v1423, %v1419
    %v1852 = vpack.c.b16 %v1428, %v1424
    %v1853 = vpack.c.b16 %v1429, %v1425
    %v1854 = vpack.c.b16 %v1430, %v1426
    %v1855 = vpack.c.b16 %v1431, %v1427
    %v1856 = vpack.c.b16 %v1436, %v1432
    %v1857 = vpack.c.b16 %v1437, %v1433
    %v1858 = vpack.c.b16 %v1438, %v1434
    %v1859 = vpack.c.b16 %v1439, %v1435
    %v1860 = vpack.c.b16 %v1444, %v1440
    %v1861 = vpack.c.b16 %v1445, %v1441
    %v1862 = vpack.c.b16 %v1446, %v1442
    %v1863 = vpack.c.b16 %v1447, %v1443
    %v1864 = vpack.c.b16 %v1452, %v1448
    %v1865 = vpack.c.b16 %v1453, %v1449
    %v1866 = vpack.c.b16 %v1454, %v1450
    %v1867 = vpack.c.b16 %v1455, %v1451
    %v1868 = vpack.c.b16 %v1460, %v1456
    %v1869 = vpack.c.b16 %v1461, %v1457
    %v1870 = vpack.c.b16 %v1462, %v1458
    %v1871 = vpack.c.b16 %v1463, %v1459
    %v1872 = vpack.c.b16 %v1468, %v1464
    %v1873 = vpack.c.b16 %v1469, %v1465
    %v1874 = vpack.c.b16 %v1470, %v1466
    %v1875 = vpack.c.b16 %v1471, %v1467
    %v1876 = vpack.c.b16 %v1476, %v1472
    %v1877 = vpack.c.b16 %v1477, %v1473
    %v1878 = vpack.c.b16 %v1478, %v1474
    %v1879 = vpack.c.b16 %v1479, %v1475
    %v1880 = vpack.c.b16 %v1484, %v1480
    %v1881 = vpack.c.b16 %v1485, %v1481
    %v1882 = vpack.c.b16 %v1486, %v1482
    %v1883 = vpack.c.b16 %v1487, %v1483
    %v1884 = vpack.c.b16 %v1492, %v1488
    %v1885 = vpack.c.b16 %v1493, %v1489
    %v1886 = vpack.c.b16 %v1494, %v1490
    %v1887 = vpack.c.b16 %v1495, %v1491
    %v1888 = vpack.c.b16 %v1500, %v1496
    %v1889 = vpack.c.b16 %v1501, %v1497
    %v1890 = vpack.c.b16 %v1502, %v1498
    %v1891 = vpack.c.b16 %v1503, %v1499
    %v1892 = vpack.c.b16 %v1508, %v1504
    %v1893 = vpack.c.b16 %v1509, %v1505
    %v1894 = vpack.c.b16 %v1510, %v1506
    %v1895 = vpack.c.b16 %v1511, %v1507
    %v1896 = vpack.c.b16 %v1516, %v1512
    %v1897 = vpack.c.b16 %v1517, %v1513
    %v1898 = vpack.c.b16 %v1518, %v1514
    %v1899 = vpack.c.b16 %v1519, %v1515
    %v1900 = vpack.c.b16 %v1524, %v1520
    %v1901 = vpack.c.b16 %v1525, %v1521
    %v1902 = vpack.c.b16 %v1526, %v1522
    %v1903 = vpack.c.b16 %v1527, %v1523
    %v1904 = vpack.c.b16 %v1532, %v1528
    %v1905 = vpack.c.b16 %v1533, %v1529
    %v1906 = vpack.c.b16 %v1534, %v1530
    %v1907 = vpack.c.b16 %v1535, %v1531
    %v1908 = vpack.c.b16 %v1540, %v1536
    %v1909 = vpack.c.b16 %v1541, %v1537
    %v1910 = vpack.c.b16 %v1542, %v1538
    %v1911 = vpack.c.b16 %v1543, %v1539
    %v1912 = vpack.c.b16 %v1548, %v1544
    %v1913 = vpack.c.b16 %v1549, %v1545
    %v1914 = vpack.c.b16 %v1550, %v1546
    %v1915 = vpack.c.b16 %v1551, %v1547
    %v1916 = vpack.c.b16 %v1556, %v1552
    %v1917 = vpack.c.b16 %v1557, %v1553
    %v1918 = vpack.c.b16 %v1558, %v1554
    %v1919 = vpack.c.b16 %v1559, %v1555
    %v1920 = vpack.c.b16 %v1564, %v1560
    %v1921 = vpack.c.b16 %v1565, %v1561
    %v1922 = vpack.c.b16 %v1566, %v1562
    %v1923 = vpack.c.b16 %v1567, %v1563
    %v1924 = vpack.c.b16 %v1572, %v1568
    %v1925 = vpack.c.b16 %v1573, %v1569
    %v1926 = vpack.c.b16 %v1574, %v1570
    %v1927 = vpack.c.b16 %v1575, %v1571
    %v1928 = vpack.c.b16 %v1580, %v1576
    %v1929 = vpack.c.b16 %v1581, %v1577
    %v1930 = vpack.c.b16 %v1582, %v1578
    %v1931 = vpack.c.b16 %v1583, %v1579
    %v1932 = vpack.c.b16 %v1588, %v1584
    %v1933 = vpack.c.b16 %v1589, %v1585
    %v1934 = vpack.c.b16 %v1590, %v1586
    %v1935 = vpack.c.b16 %v1591, %v1587
    %v1936 = vpack.c.b16 %v1596, %v1592
    %v1937 = vpack.c.b16 %v1597, %v1593
    %v1938 = vpack.c.b16 %v1598, %v1594
    %v1939 = vpack.c.b16 %v1599, %v1595
    %v1940 = vpack.c.b16 %v1604, %v1600
    %v1941 = vpack.c.b16 %v1605, %v1601
    %v1942 = vpack.c.b16 %v1606, %v1602
    %v1943 = vpack.c.b16 %v1607, %v1603
    %v1944 = vpack.c.b16 %v1612, %v1608
    %v1945 = vpack.c.b16 %v1613, %v1609
    %v1946 = vpack.c.b16 %v1614, %v1610
    %v1947 = vpack.c.b16 %v1615, %v1611
    %v1948 = vpack.c.b16 %v1620, %v1616
    %v1949 = vpack.c.b16 %v1621, %v1617
    %v1950 = vpack.c.b16 %v1622, %v1618
    %v1951 = vpack.c.b16 %v1623, %v1619
    %v1952 = vpack.c.b16 %v1628, %v1624
    %v1953 = vpack.c.b16 %v1629, %v1625
    %v1954 = vpack.c.b16 %v1630, %v1626
    %v1955 = vpack.c.b16 %v1631, %v1627
    %v1956 = vpack.c.b16 %v1636, %v1632
    %v1957 = vpack.c.b16 %v1637, %v1633
    %v1958 = vpack.c.b16 %v1638, %v1634
    %v1959 = vpack.c.b16 %v1639, %v1635
    %v1960 = vpack.c.b16 %v1644, %v1640
    %v1961 = vpack.c.b16 %v1645, %v1641
    %v1962 = vpack.c.b16 %v1646, %v1642
    %v1963 = vpack.c.b16 %v1647, %v1643
    %v1964 = vpack.c.b16 %v1652, %v1648
    %v1965 = vpack.c.b16 %v1653, %v1649
    %v1966 = vpack.c.b16 %v1654, %v1650
    %v1967 = vpack.c.b16 %v1655, %v1651
    %v1968 = vpack.c.b16 %v1660, %v1656
    %v1969 = vpack.c.b16 %v1661, %v1657
    %v1970 = vpack.c.b16 %v1662, %v1658
    %v1971 = vpack.c.b16 %v1663, %v1659
    %v1972 = vpack.c.b16 %v1668, %v1664
    %v1973 = vpack.c.b16 %v1669, %v1665
    %v1974 = vpack.c.b16 %v1670, %v1666
    %v1975 = vpack.c.b16 %v1671, %v1667
    %v1976 = vpack.c.b16 %v1676, %v1672
    %v1977 = vpack.c.b16 %v1677, %v1673
    %v1978 = vpack.c.b16 %v1678, %v1674
    %v1979 = vpack.c.b16 %v1679, %v1675
    %v1980 = vpack.c.b16 %v1684, %v1680
    %v1981 = vpack.c.b16 %v1685, %v1681
    %v1982 = vpack.c.b16 %v1686, %v1682
    %v1983 = vpack.c.b16 %v1687, %v1683
    %v1984 = vpack.c.b16 %v1692, %v1688
    %v1985 = vpack.c.b16 %v1693, %v1689
    %v1986 = vpack.c.b16 %v1694, %v1690
    %v1987 = vpack.c.b16 %v1695, %v1691
    %v1988 = vpack.c.b16 %v1700, %v1696
    %v1989 = vpack.c.b16 %v1701, %v1697
    %v1990 = vpack.c.b16 %v1702, %v1698
    %v1991 = vpack.c.b16 %v1703, %v1699
    %v1992 = vpack.c.b16 %v1708, %v1704
    %v1993 = vpack.c.b16 %v1709, %v1705
    %v1994 = vpack.c.b16 %v1710, %v1706
    %v1995 = vpack.c.b16 %v1711, %v1707
    %v1996 = vpack.c.b16 %v1716, %v1712
    %v1997 = vpack.c.b16 %v1717, %v1713
    %v1998 = vpack.c.b16 %v1718, %v1714
    %v1999 = vpack.c.b16 %v1719, %v1715
    %v2000 = vpack.c.b16 %v1724, %v1720
    %v2001 = vpack.c.b16 %v1725, %v1721
    %v2002 = vpack.c.b16 %v1726, %v1722
    %v2003 = vpack.c.b16 %v1727, %v1723
    %v2004 = vpack.c.b16 %v1732, %v1728
    %v2005 = vpack.c.b16 %v1733, %v1729
    %v2006 = vpack.c.b16 %v1734, %v1730
    %v2007 = vpack.c.b16 %v1735, %v1731
    %v2008 = vpack.c.b16 %v1740, %v1736
    %v2009 = vpack.c.b16 %v1741, %v1737
    %v2010 = vpack.c.b16 %v1742, %v1738
    %v2011 = vpack.c.b16 %v1743, %v1739
    %v2012 = vpack.c.b16 %v1748, %v1744
    %v2013 = vpack.c.b16 %v1749, %v1745
    %v2014 = vpack.c.b16 %v1750, %v1746
    %v2015 = vpack.c.b16 %v1751, %v1747
    %v2016 = vpack.c.b16 %v1756, %v1752
    %v2017 = vpack.c.b16 %v1757, %v1753
    %v2018 = vpack.c.b16 %v1758, %v1754
    %v2019 = vpack.c.b16 %v1759, %v1755
    %v2020 = vpack.c.b16 %v1764, %v1760
    %v2021 = vpack.c.b16 %v1765, %v1761
    %v2022 = vpack.c.b16 %v1766, %v1762
    %v2023 = vpack.c.b16 %v1767, %v1763
    %2280 = vmatprep.subr.bf16.mxu0 %v1769
    %2281 = vmatpush1.bf16.msra.mxu0 %v1768
    %2282 = vmatprep.subr.bf16.mxu0 %v1773
    %2283 = vmatpush1.bf16.msra.mxu0 %v1772
    %2284 = vmatprep.subr.bf16.mxu0 %v1777
    %2285 = vmatpush1.bf16.msra.mxu0 %v1776
    %2286 = vmatprep.subr.bf16.mxu0 %v1781
    %2287 = vmatpush1.bf16.msra.mxu0 %v1780
    %2288 = vmatprep.subr.bf16.mxu0 %v1785
    %2289 = vmatpush1.bf16.msra.mxu0 %v1784
    %2290 = vmatprep.subr.bf16.mxu0 %v1789
    %2291 = vmatpush1.bf16.msra.mxu0 %v1788
    %2292 = vmatprep.subr.bf16.mxu0 %v1793
    %2293 = vmatpush1.bf16.msra.mxu0 %v1792
    %2294 = vmatprep.subr.bf16.mxu0 %v1797
    %2295 = vmatpush1.bf16.msra.mxu0 %v1796
    %2296 = vmatprep.subr.bf16.mxu0 %v1801
    %2297 = vmatpush1.bf16.msra.mxu0 %v1800
    %2298 = vmatprep.subr.bf16.mxu0 %v1805
    %2299 = vmatpush1.bf16.msra.mxu0 %v1804
    %2300 = vmatprep.subr.bf16.mxu0 %v1809
    %2301 = vmatpush1.bf16.msra.mxu0 %v1808
    %2302 = vmatprep.subr.bf16.mxu0 %v1813
    %2303 = vmatpush1.bf16.msra.mxu0 %v1812
    %2304 = vmatprep.subr.bf16.mxu0 %v1817
    %2305 = vmatpush1.bf16.msra.mxu0 %v1816
    %2306 = vmatprep.subr.bf16.mxu0 %v1821
    %2307 = vmatpush1.bf16.msra.mxu0 %v1820
    %2308 = vmatprep.subr.bf16.mxu0 %v1825
    %2309 = vmatpush1.bf16.msra.mxu0 %v1824
    %2310 = vmatprep.subr.bf16.mxu0 %v1829
    %2311 = vmatpush1.bf16.msra.mxu0 %v1828
    %2312 = vmatprep.mubr.bf16.mxu0 %v715
    %2313 = vmatmul.mubr.bf16.gmra.mrb[0].mxu0 %v714
    %v2314 = vpop.f32.mrb[0].mxu0
    %v2315 = vadd.f32 %v983, %v2314
    %v2316 = vpop.f32.mrb[0].mxu0
    %v2317 = vadd.f32 %v987, %v2316
    %v2318 = vpop.f32.mrb[0].mxu0
    %v2319 = vpop.f32.mrb[0].mxu0
    %2320 = vdwg.mxu0
    %2321 = vmatprep.subr.bf16.mxu0 %v1833
    %2322 = vmatpush1.bf16.msra.mxu0 %v1832
    %2323 = vmatprep.subr.bf16.mxu0 %v1837
    %2324 = vmatpush1.bf16.msra.mxu0 %v1836
    %2325 = vmatprep.subr.bf16.mxu0 %v1841
    %2326 = vmatpush1.bf16.msra.mxu0 %v1840
    %2327 = vmatprep.subr.bf16.mxu0 %v1845
    %2328 = vmatpush1.bf16.msra.mxu0 %v1844
    %2329 = vmatprep.subr.bf16.mxu0 %v1849
    %2330 = vmatpush1.bf16.msra.mxu0 %v1848
    %2331 = vmatprep.subr.bf16.mxu0 %v1853
    %2332 = vmatpush1.bf16.msra.mxu0 %v1852
    %2333 = vmatprep.subr.bf16.mxu0 %v1857
    %2334 = vmatpush1.bf16.msra.mxu0 %v1856
    %2335 = vmatprep.subr.bf16.mxu0 %v1861
    %2336 = vmatpush1.bf16.msra.mxu0 %v1860
    %2337 = vmatprep.subr.bf16.mxu0 %v1865
    %2338 = vmatpush1.bf16.msra.mxu0 %v1864
    %2339 = vmatprep.subr.bf16.mxu0 %v1869
    %2340 = vmatpush1.bf16.msra.mxu0 %v1868
    %2341 = vmatprep.subr.bf16.mxu0 %v1873
    %2342 = vmatpush1.bf16.msra.mxu0 %v1872
    %2343 = vmatprep.subr.bf16.mxu0 %v1877
    %2344 = vmatpush1.bf16.msra.mxu0 %v1876
    %2345 = vmatprep.subr.bf16.mxu0 %v1881
    %2346 = vmatpush1.bf16.msra.mxu0 %v1880
    %2347 = vmatprep.subr.bf16.mxu0 %v1885
    %2348 = vmatpush1.bf16.msra.mxu0 %v1884
    %2349 = vmatprep.subr.bf16.mxu0 %v1889
    %2350 = vmatpush1.bf16.msra.mxu0 %v1888
    %2351 = vmatprep.subr.bf16.mxu0 %v1893
    %2352 = vmatpush1.bf16.msra.mxu0 %v1892
    %2353 = vmatprep.mubr.bf16.mxu0 %v717
    %2354 = vmatmul.mubr.bf16.gmra.mrb[0].mxu0 %v716
    %v2355 = vpop.f32.mrb[0].mxu0
    %v2356 = vadd.f32 %v2315, %v2355
    %v2357 = vpop.f32.mrb[0].mxu0
    %v2358 = vadd.f32 %v2317, %v2357
    %v2359 = vpop.f32.mrb[0].mxu0
    %v2360 = vpop.f32.mrb[0].mxu0
    %2361 = vdwg.mxu0
    %2362 = vmatprep.subr.bf16.mxu0 %v1897
    %2363 = vmatpush1.bf16.msra.mxu0 %v1896
    %2364 = vmatprep.subr.bf16.mxu0 %v1901
    %2365 = vmatpush1.bf16.msra.mxu0 %v1900
    %2366 = vmatprep.subr.bf16.mxu0 %v1905
    %2367 = vmatpush1.bf16.msra.mxu0 %v1904
    %2368 = vmatprep.subr.bf16.mxu0 %v1909
    %2369 = vmatpush1.bf16.msra.mxu0 %v1908
    %2370 = vmatprep.subr.bf16.mxu0 %v1913
    %2371 = vmatpush1.bf16.msra.mxu0 %v1912
    %2372 = vmatprep.subr.bf16.mxu0 %v1917
    %2373 = vmatpush1.bf16.msra.mxu0 %v1916
    %2374 = vmatprep.subr.bf16.mxu0 %v1921
    %2375 = vmatpush1.bf16.msra.mxu0 %v1920
    %2376 = vmatprep.subr.bf16.mxu0 %v1925
    %2377 = vmatpush1.bf16.msra.mxu0 %v1924
    %2378 = vmatprep.subr.bf16.mxu0 %v1929
    %2379 = vmatpush1.bf16.msra.mxu0 %v1928
    %2380 = vmatprep.subr.bf16.mxu0 %v1933
    %2381 = vmatpush1.bf16.msra.mxu0 %v1932
    %2382 = vmatprep.subr.bf16.mxu0 %v1937
    %2383 = vmatpush1.bf16.msra.mxu0 %v1936
    %2384 = vmatprep.subr.bf16.mxu0 %v1941
    %2385 = vmatpush1.bf16.msra.mxu0 %v1940
    %2386 = vmatprep.subr.bf16.mxu0 %v1945
    %2387 = vmatpush1.bf16.msra.mxu0 %v1944
    %2388 = vmatprep.subr.bf16.mxu0 %v1949
    %2389 = vmatpush1.bf16.msra.mxu0 %v1948
    %2390 = vmatprep.subr.bf16.mxu0 %v1953
    %2391 = vmatpush1.bf16.msra.mxu0 %v1952
    %2392 = vmatprep.subr.bf16.mxu0 %v1957
    %2393 = vmatpush1.bf16.msra.mxu0 %v1956
    %2394 = vmatprep.mubr.bf16.mxu0 %v719
    %2395 = vmatmul.mubr.bf16.gmra.mrb[0].mxu0 %v718
    %v2396 = vpop.f32.mrb[0].mxu0
    %v2397 = vadd.f32 %v2356, %v2396
    %v2398 = vpop.f32.mrb[0].mxu0
    %v2399 = vadd.f32 %v2358, %v2398
    %v2400 = vpop.f32.mrb[0].mxu0
    %v2401 = vpop.f32.mrb[0].mxu0
    %2402 = vdwg.mxu0
    %2403 = vmatprep.subr.bf16.mxu0 %v1961
    %2404 = vmatpush1.bf16.msra.mxu0 %v1960
    %2405 = vmatprep.subr.bf16.mxu0 %v1965
    %2406 = vmatpush1.bf16.msra.mxu0 %v1964
    %2407 = vmatprep.subr.bf16.mxu0 %v1969
    %2408 = vmatpush1.bf16.msra.mxu0 %v1968
    %2409 = vmatprep.subr.bf16.mxu0 %v1973
    %2410 = vmatpush1.bf16.msra.mxu0 %v1972
    %2411 = vmatprep.subr.bf16.mxu0 %v1977
    %2412 = vmatpush1.bf16.msra.mxu0 %v1976
    %2413 = vmatprep.subr.bf16.mxu0 %v1981
    %2414 = vmatpush1.bf16.msra.mxu0 %v1980
    %2415 = vmatprep.subr.bf16.mxu0 %v1985
    %2416 = vmatpush1.bf16.msra.mxu0 %v1984
    %2417 = vmatprep.subr.bf16.mxu0 %v1989
    %2418 = vmatpush1.bf16.msra.mxu0 %v1988
    %2419 = vmatprep.subr.bf16.mxu0 %v1993
    %2420 = vmatpush1.bf16.msra.mxu0 %v1992
    %2421 = vmatprep.subr.bf16.mxu0 %v1997
    %2422 = vmatpush1.bf16.msra.mxu0 %v1996
    %2423 = vmatprep.subr.bf16.mxu0 %v2001
    %2424 = vmatpush1.bf16.msra.mxu0 %v2000
    %2425 = vmatprep.subr.bf16.mxu0 %v2005
    %2426 = vmatpush1.bf16.msra.mxu0 %v2004
    %2427 = vmatprep.subr.bf16.mxu0 %v2009
    %2428 = vmatpush1.bf16.msra.mxu0 %v2008
    %2429 = vmatprep.subr.bf16.mxu0 %v2013
    %2430 = vmatpush1.bf16.msra.mxu0 %v2012
    %2431 = vmatprep.subr.bf16.mxu0 %v2017
    %2432 = vmatpush1.bf16.msra.mxu0 %v2016
    %2433 = vmatprep.subr.bf16.mxu0 %v2021
    %2434 = vmatpush1.bf16.msra.mxu0 %v2020
    %2435 = vmatprep.mubr.bf16.mxu0 %v721
    %2436 = vmatmul.mubr.bf16.gmra.mrb[0].mxu0 %v720
    %v2437 = vpop.f32.mrb[0].mxu0
    %v2438 = vadd.f32 %v2397, %v2437
    %v2439 = vpop.f32.mrb[0].mxu0
    %v2440 = vadd.f32 %v2399, %v2439
    %v2441 = vpop.f32.mrb[0].mxu0
    %v2442 = vpop.f32.mrb[0].mxu0
    %2443 = vdwg.mxu0
    %2444 = vmatprep.subr.bf16.mxu0 %v1771
    %2445 = vmatpush1.bf16.msra.mxu0 %v1770
    %2446 = vmatprep.subr.bf16.mxu0 %v1775
    %2447 = vmatpush1.bf16.msra.mxu0 %v1774
    %2448 = vmatprep.subr.bf16.mxu0 %v1779
    %2449 = vmatpush1.bf16.msra.mxu0 %v1778
    %2450 = vmatprep.subr.bf16.mxu0 %v1783
    %2451 = vmatpush1.bf16.msra.mxu0 %v1782
    %2452 = vmatprep.subr.bf16.mxu0 %v1787
    %2453 = vmatpush1.bf16.msra.mxu0 %v1786
    %2454 = vmatprep.subr.bf16.mxu0 %v1791
    %2455 = vmatpush1.bf16.msra.mxu0 %v1790
    %2456 = vmatprep.subr.bf16.mxu0 %v1795
    %2457 = vmatpush1.bf16.msra.mxu0 %v1794
    %2458 = vmatprep.subr.bf16.mxu0 %v1799
    %2459 = vmatpush1.bf16.msra.mxu0 %v1798
    %2460 = vmatprep.subr.bf16.mxu0 %v1803
    %2461 = vmatpush1.bf16.msra.mxu0 %v1802
    %2462 = vmatprep.subr.bf16.mxu0 %v1807
    %2463 = vmatpush1.bf16.msra.mxu0 %v1806
    %2464 = vmatprep.subr.bf16.mxu0 %v1811
    %2465 = vmatpush1.bf16.msra.mxu0 %v1810
    %2466 = vmatprep.subr.bf16.mxu0 %v1815
    %2467 = vmatpush1.bf16.msra.mxu0 %v1814
    %2468 = vmatprep.subr.bf16.mxu0 %v1819
    %2469 = vmatpush1.bf16.msra.mxu0 %v1818
    %2470 = vmatprep.subr.bf16.mxu0 %v1823
    %2471 = vmatpush1.bf16.msra.mxu0 %v1822
    %2472 = vmatprep.subr.bf16.mxu0 %v1827
    %2473 = vmatpush1.bf16.msra.mxu0 %v1826
    %2474 = vmatprep.subr.bf16.mxu0 %v1831
    %2475 = vmatpush1.bf16.msra.mxu0 %v1830
    %2476 = vmatprep.mubr.bf16.mxu0 %v715
    %2477 = vmatmul.mubr.bf16.gmra.mrb[0].mxu0 %v714
    %v2478 = vpop.f32.mrb[0].mxu0
    %v2479 = vadd.f32 %v991, %v2478
    %v2480 = vpop.f32.mrb[0].mxu0
    %v2481 = vadd.f32 %v995, %v2480
    %v2482 = vpop.f32.mrb[0].mxu0
    %v2483 = vpop.f32.mrb[0].mxu0
    %2484 = vdwg.mxu0
    %2485 = vmatprep.subr.bf16.mxu0 %v1835
    %2486 = vmatpush1.bf16.msra.mxu0 %v1834
    %2487 = vmatprep.subr.bf16.mxu0 %v1839
    %2488 = vmatpush1.bf16.msra.mxu0 %v1838
    %2489 = vmatprep.subr.bf16.mxu0 %v1843
    %2490 = vmatpush1.bf16.msra.mxu0 %v1842
    %2491 = vmatprep.subr.bf16.mxu0 %v1847
    %2492 = vmatpush1.bf16.msra.mxu0 %v1846
    %2493 = vmatprep.subr.bf16.mxu0 %v1851
    %2494 = vmatpush1.bf16.msra.mxu0 %v1850
    %2495 = vmatprep.subr.bf16.mxu0 %v1855
    %2496 = vmatpush1.bf16.msra.mxu0 %v1854
    %2497 = vmatprep.subr.bf16.mxu0 %v1859
    %2498 = vmatpush1.bf16.msra.mxu0 %v1858
    %2499 = vmatprep.subr.bf16.mxu0 %v1863
    %2500 = vmatpush1.bf16.msra.mxu0 %v1862
    %2501 = vmatprep.subr.bf16.mxu0 %v1867
    %2502 = vmatpush1.bf16.msra.mxu0 %v1866
    %2503 = vmatprep.subr.bf16.mxu0 %v1871
    %2504 = vmatpush1.bf16.msra.mxu0 %v1870
    %2505 = vmatprep.subr.bf16.mxu0 %v1875
    %2506 = vmatpush1.bf16.msra.mxu0 %v1874
    %2507 = vmatprep.subr.bf16.mxu0 %v1879
    %2508 = vmatpush1.bf16.msra.mxu0 %v1878
    %2509 = vmatprep.subr.bf16.mxu0 %v1883
    %2510 = vmatpush1.bf16.msra.mxu0 %v1882
    %2511 = vmatprep.subr.bf16.mxu0 %v1887
    %2512 = vmatpush1.bf16.msra.mxu0 %v1886
    %2513 = vmatprep.subr.bf16.mxu0 %v1891
    %2514 = vmatpush1.bf16.msra.mxu0 %v1890
    %2515 = vmatprep.subr.bf16.mxu0 %v1895
    %2516 = vmatpush1.bf16.msra.mxu0 %v1894
    %2517 = vmatprep.mubr.bf16.mxu0 %v717
    %2518 = vmatmul.mubr.bf16.gmra.mrb[0].mxu0 %v716
    %v2519 = vpop.f32.mrb[0].mxu0
    %v2520 = vadd.f32 %v2479, %v2519
    %v2521 = vpop.f32.mrb[0].mxu0
    %v2522 = vadd.f32 %v2481, %v2521
    %v2523 = vpop.f32.mrb[0].mxu0
    %v2524 = vpop.f32.mrb[0].mxu0
    %2525 = vdwg.mxu0
    %2526 = vmatprep.subr.bf16.mxu0 %v1899
    %2527 = vmatpush1.bf16.msra.mxu0 %v1898
    %2528 = vmatprep.subr.bf16.mxu0 %v1903
    %2529 = vmatpush1.bf16.msra.mxu0 %v1902
    %2530 = vmatprep.subr.bf16.mxu0 %v1907
    %2531 = vmatpush1.bf16.msra.mxu0 %v1906
    %2532 = vmatprep.subr.bf16.mxu0 %v1911
    %2533 = vmatpush1.bf16.msra.mxu0 %v1910
    %2534 = vmatprep.subr.bf16.mxu0 %v1915
    %2535 = vmatpush1.bf16.msra.mxu0 %v1914
    %2536 = vmatprep.subr.bf16.mxu0 %v1919
    %2537 = vmatpush1.bf16.msra.mxu0 %v1918
    %2538 = vmatprep.subr.bf16.mxu0 %v1923
    %2539 = vmatpush1.bf16.msra.mxu0 %v1922
    %2540 = vmatprep.subr.bf16.mxu0 %v1927
    %2541 = vmatpush1.bf16.msra.mxu0 %v1926
    %2542 = vmatprep.subr.bf16.mxu0 %v1931
    %2543 = vmatpush1.bf16.msra.mxu0 %v1930
    %2544 = vmatprep.subr.bf16.mxu0 %v1935
    %2545 = vmatpush1.bf16.msra.mxu0 %v1934
    %2546 = vmatprep.subr.bf16.mxu0 %v1939
    %2547 = vmatpush1.bf16.msra.mxu0 %v1938
    %2548 = vmatprep.subr.bf16.mxu0 %v1943
    %2549 = vmatpush1.bf16.msra.mxu0 %v1942
    %2550 = vmatprep.subr.bf16.mxu0 %v1947
    %2551 = vmatpush1.bf16.msra.mxu0 %v1946
    %2552 = vmatprep.subr.bf16.mxu0 %v1951
    %2553 = vmatpush1.bf16.msra.mxu0 %v1950
    %2554 = vmatprep.subr.bf16.mxu0 %v1955
    %2555 = vmatpush1.bf16.msra.mxu0 %v1954
    %2556 = vmatprep.subr.bf16.mxu0 %v1959
    %2557 = vmatpush1.bf16.msra.mxu0 %v1958
    %2558 = vmatprep.mubr.bf16.mxu0 %v719
    %2559 = vmatmul.mubr.bf16.gmra.mrb[0].mxu0 %v718
    %v2560 = vpop.f32.mrb[0].mxu0
    %v2561 = vadd.f32 %v2520, %v2560
    %v2562 = vpop.f32.mrb[0].mxu0
    %v2563 = vadd.f32 %v2522, %v2562
    %v2564 = vpop.f32.mrb[0].mxu0
    %v2565 = vpop.f32.mrb[0].mxu0
    %2566 = vdwg.mxu0
    %2567 = vmatprep.subr.bf16.mxu0 %v1963
    %2568 = vmatpush1.bf16.msra.mxu0 %v1962
    %2569 = vmatprep.subr.bf16.mxu0 %v1967
    %2570 = vmatpush1.bf16.msra.mxu0 %v1966
    %2571 = vmatprep.subr.bf16.mxu0 %v1971
    %2572 = vmatpush1.bf16.msra.mxu0 %v1970
    %2573 = vmatprep.subr.bf16.mxu0 %v1975
    %2574 = vmatpush1.bf16.msra.mxu0 %v1974
    %2575 = vmatprep.subr.bf16.mxu0 %v1979
    %2576 = vmatpush1.bf16.msra.mxu0 %v1978
    %2577 = vmatprep.subr.bf16.mxu0 %v1983
    %2578 = vmatpush1.bf16.msra.mxu0 %v1982
    %2579 = vmatprep.subr.bf16.mxu0 %v1987
    %2580 = vmatpush1.bf16.msra.mxu0 %v1986
    %2581 = vmatprep.subr.bf16.mxu0 %v1991
    %2582 = vmatpush1.bf16.msra.mxu0 %v1990
    %2583 = vmatprep.subr.bf16.mxu0 %v1995
    %2584 = vmatpush1.bf16.msra.mxu0 %v1994
    %2585 = vmatprep.subr.bf16.mxu0 %v1999
    %2586 = vmatpush1.bf16.msra.mxu0 %v1998
    %2587 = vmatprep.subr.bf16.mxu0 %v2003
    %2588 = vmatpush1.bf16.msra.mxu0 %v2002
    %2589 = vmatprep.subr.bf16.mxu0 %v2007
    %2590 = vmatpush1.bf16.msra.mxu0 %v2006
    %2591 = vmatprep.subr.bf16.mxu0 %v2011
    %2592 = vmatpush1.bf16.msra.mxu0 %v2010
    %2593 = vmatprep.subr.bf16.mxu0 %v2015
    %2594 = vmatpush1.bf16.msra.mxu0 %v2014
    %2595 = vmatprep.subr.bf16.mxu0 %v2019
    %2596 = vmatpush1.bf16.msra.mxu0 %v2018
    %2597 = vmatprep.subr.bf16.mxu0 %v2023
    %2598 = vmatpush1.bf16.msra.mxu0 %v2022
    %2599 = vmatprep.mubr.bf16.mxu0 %v721
    %2600 = vmatmul.mubr.bf16.gmra.mrb[0].mxu0 %v720
    %v2601 = vpop.f32.mrb[0].mxu0
    %v2602 = vadd.f32 %v2561, %v2601
    %v2603 = vpop.f32.mrb[0].mxu0
    %v2604 = vadd.f32 %v2563, %v2603
    %v2605 = vpop.f32.mrb[0].mxu0
    %v2606 = vpop.f32.mrb[0].mxu0
    %2607 = vdwg.mxu0
    %v2608 = vmax.f32 %v2438, 0.0
    %v2609 = vmax.f32 %v2440, 0.0
    %v2610 = vmax.f32 %v2602, 0.0
    %v2611 = vmax.f32 %v2604, 0.0
    %v2612 = vpack.c.bf16 %v2608, %v2608
    %v2613 = vpack.c.bf16 %v2609, %v2609
    %v2614 = vpack.c.bf16 %v2610, %v2610
    %v2615 = vpack.c.bf16 %v2611, %v2611
    %v2616 = vld [vmem:[#allocation10] sm:$0xff]
    %v2617 = vld [vmem:[#allocation10 + $0x8] sm:$0xff]
    %v2618 = vld [vmem:[#allocation10 + $0x10] sm:$0xff]
    %v2619 = vld [vmem:[#allocation10 + $0x18] sm:$0xff]
    %v2620 = vld [vmem:[#allocation10 + $0x20] sm:$0xff]
    %v2621 = vld [vmem:[#allocation10 + $0x28] sm:$0xff]
    %v2622 = vld [vmem:[#allocation10 + $0x30] sm:$0xff]
    %v2623 = vld [vmem:[#allocation10 + $0x38] sm:$0xff]
    %v2624 = vld [vmem:[#allocation10 + $0x40] sm:$0xff]
    %v2625 = vld [vmem:[#allocation10 + $0x48] sm:$0xff]
    %v2626 = vld [vmem:[#allocation10 + $0x50] sm:$0xff]
    %v2627 = vld [vmem:[#allocation10 + $0x58] sm:$0xff]
    %v2628 = vld [vmem:[#allocation10 + $0x60] sm:$0xff]
    %v2629 = vld [vmem:[#allocation10 + $0x68] sm:$0xff]
    %v2630 = vld [vmem:[#allocation10 + $0x70] sm:$0xff]
    %v2631 = vld [vmem:[#allocation10 + $0x78] sm:$0xff]
    %v2632 = vld [vmem:[#allocation10 + $0x80] sm:$0xff]
    %v2633 = vld [vmem:[#allocation10 + $0x88] sm:$0xff]
    %v2634 = vld [vmem:[#allocation10 + $0x90] sm:$0xff]
    %v2635 = vld [vmem:[#allocation10 + $0x98] sm:$0xff]
    %v2636 = vld [vmem:[#allocation10 + $0xa0] sm:$0xff]
    %v2637 = vld [vmem:[#allocation10 + $0xa8] sm:$0xff]
    %v2638 = vld [vmem:[#allocation10 + $0xb0] sm:$0xff]
    %v2639 = vld [vmem:[#allocation10 + $0xb8] sm:$0xff]
    %v2640 = vld [vmem:[#allocation10 + $0xc0] sm:$0xff]
    %v2641 = vld [vmem:[#allocation10 + $0xc8] sm:$0xff]
    %v2642 = vld [vmem:[#allocation10 + $0xd0] sm:$0xff]
    %v2643 = vld [vmem:[#allocation10 + $0xd8] sm:$0xff]
    %v2644 = vld [vmem:[#allocation10 + $0xe0] sm:$0xff]
    %v2645 = vld [vmem:[#allocation10 + $0xe8] sm:$0xff]
    %v2646 = vld [vmem:[#allocation10 + $0xf0] sm:$0xff]
    %v2647 = vld [vmem:[#allocation10 + $0xf8] sm:$0xff]
    %v2648 = vld [vmem:[#allocation10 + $0x100] sm:$0xff]
    %v2649 = vld [vmem:[#allocation10 + $0x108] sm:$0xff]
    %v2650 = vld [vmem:[#allocation10 + $0x110] sm:$0xff]
    %v2651 = vld [vmem:[#allocation10 + $0x118] sm:$0xff]
    %v2652 = vld [vmem:[#allocation10 + $0x120] sm:$0xff]
    %v2653 = vld [vmem:[#allocation10 + $0x128] sm:$0xff]
    %v2654 = vld [vmem:[#allocation10 + $0x130] sm:$0xff]
    %v2655 = vld [vmem:[#allocation10 + $0x138] sm:$0xff]
    %v2656 = vld [vmem:[#allocation10 + $0x140] sm:$0xff]
    %v2657 = vld [vmem:[#allocation10 + $0x148] sm:$0xff]
    %v2658 = vld [vmem:[#allocation10 + $0x150] sm:$0xff]
    %v2659 = vld [vmem:[#allocation10 + $0x158] sm:$0xff]
    %v2660 = vld [vmem:[#allocation10 + $0x160] sm:$0xff]
    %v2661 = vld [vmem:[#allocation10 + $0x168] sm:$0xff]
    %v2662 = vld [vmem:[#allocation10 + $0x170] sm:$0xff]
    %v2663 = vld [vmem:[#allocation10 + $0x178] sm:$0xff]
    %v2664 = vld [vmem:[#allocation10 + $0x180] sm:$0xff]
    %v2665 = vld [vmem:[#allocation10 + $0x188] sm:$0xff]
    %v2666 = vld [vmem:[#allocation10 + $0x190] sm:$0xff]
    %v2667 = vld [vmem:[#allocation10 + $0x198] sm:$0xff]
    %v2668 = vld [vmem:[#allocation10 + $0x1a0] sm:$0xff]
    %v2669 = vld [vmem:[#allocation10 + $0x1a8] sm:$0xff]
    %v2670 = vld [vmem:[#allocation10 + $0x1b0] sm:$0xff]
    %v2671 = vld [vmem:[#allocation10 + $0x1b8] sm:$0xff]
    %v2672 = vld [vmem:[#allocation10 + $0x1c0] sm:$0xff]
    %v2673 = vld [vmem:[#allocation10 + $0x1c8] sm:$0xff]
    %v2674 = vld [vmem:[#allocation10 + $0x1d0] sm:$0xff]
    %v2675 = vld [vmem:[#allocation10 + $0x1d8] sm:$0xff]
    %v2676 = vld [vmem:[#allocation10 + $0x1e0] sm:$0xff]
    %v2677 = vld [vmem:[#allocation10 + $0x1e8] sm:$0xff]
    %v2678 = vld [vmem:[#allocation10 + $0x1f0] sm:$0xff]
    %v2679 = vld [vmem:[#allocation10 + $0x1f8] sm:$0xff]
    %v2680 = vld [vmem:[%s6] sm:$0x3]
    %v2682 = vlaneseq
    %v2683 = vshrl.u32 %v2682, 7
    %v2684 = vsub.s32 0, %v2683
    %v2685 = vrot.slane %v2680, %v2684
    %v2686 = vlaneseq
    %v2687 = vshrl.u32 %v2686, 7
    %v2688 = vsub.s32 1, %v2687
    %v2689 = vrot.slane %v2680, %v2688
    %v2756 = vunpack.c.l.b16 %v2616
    %v2757 = vunpack.c.h.b16 %v2616
    %v2758 = vunpack.c.l.b16 %v2617
    %v2759 = vunpack.c.h.b16 %v2617
    %v2760 = vunpack.c.l.b16 %v2618
    %v2761 = vunpack.c.h.b16 %v2618
    %v2762 = vunpack.c.l.b16 %v2619
    %v2763 = vunpack.c.h.b16 %v2619
    %v2764 = vunpack.c.l.b16 %v2620
    %v2765 = vunpack.c.h.b16 %v2620
    %v2766 = vunpack.c.l.b16 %v2621
    %v2767 = vunpack.c.h.b16 %v2621
    %v2768 = vunpack.c.l.b16 %v2622
    %v2769 = vunpack.c.h.b16 %v2622
    %v2770 = vunpack.c.l.b16 %v2623
    %v2771 = vunpack.c.h.b16 %v2623
    %v2772 = vunpack.c.l.b16 %v2624
    %v2773 = vunpack.c.h.b16 %v2624
    %v2774 = vunpack.c.l.b16 %v2625
    %v2775 = vunpack.c.h.b16 %v2625
    %v2776 = vunpack.c.l.b16 %v2626
    %v2777 = vunpack.c.h.b16 %v2626
    %v2778 = vunpack.c.l.b16 %v2627
    %v2779 = vunpack.c.h.b16 %v2627
    %v2780 = vunpack.c.l.b16 %v2628
    %v2781 = vunpack.c.h.b16 %v2628
    %v2782 = vunpack.c.l.b16 %v2629
    %v2783 = vunpack.c.h.b16 %v2629
    %v2784 = vunpack.c.l.b16 %v2630
    %v2785 = vunpack.c.h.b16 %v2630
    %v2786 = vunpack.c.l.b16 %v2631
    %v2787 = vunpack.c.h.b16 %v2631
    %v2788 = vunpack.c.l.b16 %v2632
    %v2789 = vunpack.c.h.b16 %v2632
    %v2790 = vunpack.c.l.b16 %v2633
    %v2791 = vunpack.c.h.b16 %v2633
    %v2792 = vunpack.c.l.b16 %v2634
    %v2793 = vunpack.c.h.b16 %v2634
    %v2794 = vunpack.c.l.b16 %v2635
    %v2795 = vunpack.c.h.b16 %v2635
    %v2796 = vunpack.c.l.b16 %v2636
    %v2797 = vunpack.c.h.b16 %v2636
    %v2798 = vunpack.c.l.b16 %v2637
    %v2799 = vunpack.c.h.b16 %v2637
    %v2800 = vunpack.c.l.b16 %v2638
    %v2801 = vunpack.c.h.b16 %v2638
    %v2802 = vunpack.c.l.b16 %v2639
    %v2803 = vunpack.c.h.b16 %v2639
    %v2804 = vunpack.c.l.b16 %v2640
    %v2805 = vunpack.c.h.b16 %v2640
    %v2806 = vunpack.c.l.b16 %v2641
    %v2807 = vunpack.c.h.b16 %v2641
    %v2808 = vunpack.c.l.b16 %v2642
    %v2809 = vunpack.c.h.b16 %v2642
    %v2810 = vunpack.c.l.b16 %v2643
    %v2811 = vunpack.c.h.b16 %v2643
    %v2812 = vunpack.c.l.b16 %v2644
    %v2813 = vunpack.c.h.b16 %v2644
    %v2814 = vunpack.c.l.b16 %v2645
    %v2815 = vunpack.c.h.b16 %v2645
    %v2816 = vunpack.c.l.b16 %v2646
    %v2817 = vunpack.c.h.b16 %v2646
    %v2818 = vunpack.c.l.b16 %v2647
    %v2819 = vunpack.c.h.b16 %v2647
    %v2820 = vunpack.c.l.b16 %v2648
    %v2821 = vunpack.c.h.b16 %v2648
    %v2822 = vunpack.c.l.b16 %v2649
    %v2823 = vunpack.c.h.b16 %v2649
    %v2824 = vunpack.c.l.b16 %v2650
    %v2825 = vunpack.c.h.b16 %v2650
    %v2826 = vunpack.c.l.b16 %v2651
    %v2827 = vunpack.c.h.b16 %v2651
    %v2828 = vunpack.c.l.b16 %v2652
    %v2829 = vunpack.c.h.b16 %v2652
    %v2830 = vunpack.c.l.b16 %v2653
    %v2831 = vunpack.c.h.b16 %v2653
    %v2832 = vunpack.c.l.b16 %v2654
    %v2833 = vunpack.c.h.b16 %v2654
    %v2834 = vunpack.c.l.b16 %v2655
    %v2835 = vunpack.c.h.b16 %v2655
    %v2836 = vunpack.c.l.b16 %v2656
    %v2837 = vunpack.c.h.b16 %v2656
    %v2838 = vunpack.c.l.b16 %v2657
    %v2839 = vunpack.c.h.b16 %v2657
    %v2840 = vunpack.c.l.b16 %v2658
    %v2841 = vunpack.c.h.b16 %v2658
    %v2842 = vunpack.c.l.b16 %v2659
    %v2843 = vunpack.c.h.b16 %v2659
    %v2844 = vunpack.c.l.b16 %v2660
    %v2845 = vunpack.c.h.b16 %v2660
    %v2846 = vunpack.c.l.b16 %v2661
    %v2847 = vunpack.c.h.b16 %v2661
    %v2848 = vunpack.c.l.b16 %v2662
    %v2849 = vunpack.c.h.b16 %v2662
    %v2850 = vunpack.c.l.b16 %v2663
    %v2851 = vunpack.c.h.b16 %v2663
    %v2852 = vunpack.c.l.b16 %v2664
    %v2853 = vunpack.c.h.b16 %v2664
    %v2854 = vunpack.c.l.b16 %v2665
    %v2855 = vunpack.c.h.b16 %v2665
    %v2856 = vunpack.c.l.b16 %v2666
    %v2857 = vunpack.c.h.b16 %v2666
    %v2858 = vunpack.c.l.b16 %v2667
    %v2859 = vunpack.c.h.b16 %v2667
    %v2860 = vunpack.c.l.b16 %v2668
    %v2861 = vunpack.c.h.b16 %v2668
    %v2862 = vunpack.c.l.b16 %v2669
    %v2863 = vunpack.c.h.b16 %v2669
    %v2864 = vunpack.c.l.b16 %v2670
    %v2865 = vunpack.c.h.b16 %v2670
    %v2866 = vunpack.c.l.b16 %v2671
    %v2867 = vunpack.c.h.b16 %v2671
    %v2868 = vunpack.c.l.b16 %v2672
    %v2869 = vunpack.c.h.b16 %v2672
    %v2870 = vunpack.c.l.b16 %v2673
    %v2871 = vunpack.c.h.b16 %v2673
    %v2872 = vunpack.c.l.b16 %v2674
    %v2873 = vunpack.c.h.b16 %v2674
    %v2874 = vunpack.c.l.b16 %v2675
    %v2875 = vunpack.c.h.b16 %v2675
    %v2876 = vunpack.c.l.b16 %v2676
    %v2877 = vunpack.c.h.b16 %v2676
    %v2878 = vunpack.c.l.b16 %v2677
    %v2879 = vunpack.c.h.b16 %v2677
    %v2880 = vunpack.c.l.b16 %v2678
    %v2881 = vunpack.c.h.b16 %v2678
    %v2882 = vunpack.c.l.b16 %v2679
    %v2883 = vunpack.c.h.b16 %v2679
    %v2884 = vpack.c.b16 %v2758, %v2756
    %v2885 = vpack.c.b16 %v2759, %v2757
    %v2886 = vpack.c.b16 %v2762, %v2760
    %v2887 = vpack.c.b16 %v2763, %v2761
    %v2888 = vpack.c.b16 %v2766, %v2764
    %v2889 = vpack.c.b16 %v2767, %v2765
    %v2890 = vpack.c.b16 %v2770, %v2768
    %v2891 = vpack.c.b16 %v2771, %v2769
    %v2892 = vpack.c.b16 %v2774, %v2772
    %v2893 = vpack.c.b16 %v2775, %v2773
    %v2894 = vpack.c.b16 %v2778, %v2776
    %v2895 = vpack.c.b16 %v2779, %v2777
    %v2896 = vpack.c.b16 %v2782, %v2780
    %v2897 = vpack.c.b16 %v2783, %v2781
    %v2898 = vpack.c.b16 %v2786, %v2784
    %v2899 = vpack.c.b16 %v2787, %v2785
    %v2900 = vpack.c.b16 %v2790, %v2788
    %v2901 = vpack.c.b16 %v2791, %v2789
    %v2902 = vpack.c.b16 %v2794, %v2792
    %v2903 = vpack.c.b16 %v2795, %v2793
    %v2904 = vpack.c.b16 %v2798, %v2796
    %v2905 = vpack.c.b16 %v2799, %v2797
    %v2906 = vpack.c.b16 %v2802, %v2800
    %v2907 = vpack.c.b16 %v2803, %v2801
    %v2908 = vpack.c.b16 %v2806, %v2804
    %v2909 = vpack.c.b16 %v2807, %v2805
    %v2910 = vpack.c.b16 %v2810, %v2808
    %v2911 = vpack.c.b16 %v2811, %v2809
    %v2912 = vpack.c.b16 %v2814, %v2812
    %v2913 = vpack.c.b16 %v2815, %v2813
    %v2914 = vpack.c.b16 %v2818, %v2816
    %v2915 = vpack.c.b16 %v2819, %v2817
    %v2916 = vpack.c.b16 %v2822, %v2820
    %v2917 = vpack.c.b16 %v2823, %v2821
    %v2918 = vpack.c.b16 %v2826, %v2824
    %v2919 = vpack.c.b16 %v2827, %v2825
    %v2920 = vpack.c.b16 %v2830, %v2828
    %v2921 = vpack.c.b16 %v2831, %v2829
    %v2922 = vpack.c.b16 %v2834, %v2832
    %v2923 = vpack.c.b16 %v2835, %v2833
    %v2924 = vpack.c.b16 %v2838, %v2836
    %v2925 = vpack.c.b16 %v2839, %v2837
    %v2926 = vpack.c.b16 %v2842, %v2840
    %v2927 = vpack.c.b16 %v2843, %v2841
    %v2928 = vpack.c.b16 %v2846, %v2844
    %v2929 = vpack.c.b16 %v2847, %v2845
    %v2930 = vpack.c.b16 %v2850, %v2848
    %v2931 = vpack.c.b16 %v2851, %v2849
    %v2932 = vpack.c.b16 %v2854, %v2852
    %v2933 = vpack.c.b16 %v2855, %v2853
    %v2934 = vpack.c.b16 %v2858, %v2856
    %v2935 = vpack.c.b16 %v2859, %v2857
    %v2936 = vpack.c.b16 %v2862, %v2860
    %v2937 = vpack.c.b16 %v2863, %v2861
    %v2938 = vpack.c.b16 %v2866, %v2864
    %v2939 = vpack.c.b16 %v2867, %v2865
    %v2940 = vpack.c.b16 %v2870, %v2868
    %v2941 = vpack.c.b16 %v2871, %v2869
    %v2942 = vpack.c.b16 %v2874, %v2872
    %v2943 = vpack.c.b16 %v2875, %v2873
    %v2944 = vpack.c.b16 %v2878, %v2876
    %v2945 = vpack.c.b16 %v2879, %v2877
    %v2946 = vpack.c.b16 %v2882, %v2880
    %v2947 = vpack.c.b16 %v2883, %v2881
    %3012 = vmatprep.subr.bf16.mxu0 %v2885
    %3013 = vmatpush1.bf16.msra.mxu0 %v2884
    %3014 = vmatprep.subr.bf16.mxu0 %v2887
    %3015 = vmatpush1.bf16.msra.mxu0 %v2886
    %3016 = vmatprep.subr.bf16.mxu0 %v2889
    %3017 = vmatpush1.bf16.msra.mxu0 %v2888
    %3018 = vmatprep.subr.bf16.mxu0 %v2891
    %3019 = vmatpush1.bf16.msra.mxu0 %v2890
    %3020 = vmatprep.subr.bf16.mxu0 %v2893
    %3021 = vmatpush1.bf16.msra.mxu0 %v2892
    %3022 = vmatprep.subr.bf16.mxu0 %v2895
    %3023 = vmatpush1.bf16.msra.mxu0 %v2894
    %3024 = vmatprep.subr.bf16.mxu0 %v2897
    %3025 = vmatpush1.bf16.msra.mxu0 %v2896
    %3026 = vmatprep.subr.bf16.mxu0 %v2899
    %3027 = vmatpush1.bf16.msra.mxu0 %v2898
    %3028 = vmatprep.subr.bf16.mxu0 %v2901
    %3029 = vmatpush1.bf16.msra.mxu0 %v2900
    %3030 = vmatprep.subr.bf16.mxu0 %v2903
    %3031 = vmatpush1.bf16.msra.mxu0 %v2902
    %3032 = vmatprep.subr.bf16.mxu0 %v2905
    %3033 = vmatpush1.bf16.msra.mxu0 %v2904
    %3034 = vmatprep.subr.bf16.mxu0 %v2907
    %3035 = vmatpush1.bf16.msra.mxu0 %v2906
    %3036 = vmatprep.subr.bf16.mxu0 %v2909
    %3037 = vmatpush1.bf16.msra.mxu0 %v2908
    %3038 = vmatprep.subr.bf16.mxu0 %v2911
    %3039 = vmatpush1.bf16.msra.mxu0 %v2910
    %3040 = vmatprep.subr.bf16.mxu0 %v2913
    %3041 = vmatpush1.bf16.msra.mxu0 %v2912
    %3042 = vmatprep.subr.bf16.mxu0 %v2915
    %3043 = vmatpush1.bf16.msra.mxu0 %v2914
    %3044 = vmatprep.mubr.bf16.mxu0 %v2613
    %3045 = vmatmul.mubr.bf16.gmra.mrb[0].mxu0 %v2612
    %v3046 = vpop.f32.mrb[0].mxu0
    %v3047 = vadd.f32 %v2685, %v3046
    %v3048 = vpop.f32.mrb[0].mxu0
    %v3049 = vadd.f32 %v2689, %v3048
    %v3050 = vpop.f32.mrb[0].mxu0
    %v3051 = vpop.f32.mrb[0].mxu0
    %3052 = vdwg.mxu0
    %3053 = vmatprep.subr.bf16.mxu0 %v2917
    %3054 = vmatpush1.bf16.msra.mxu0 %v2916
    %3055 = vmatprep.subr.bf16.mxu0 %v2919
    %3056 = vmatpush1.bf16.msra.mxu0 %v2918
    %3057 = vmatprep.subr.bf16.mxu0 %v2921
    %3058 = vmatpush1.bf16.msra.mxu0 %v2920
    %3059 = vmatprep.subr.bf16.mxu0 %v2923
    %3060 = vmatpush1.bf16.msra.mxu0 %v2922
    %3061 = vmatprep.subr.bf16.mxu0 %v2925
    %3062 = vmatpush1.bf16.msra.mxu0 %v2924
    %3063 = vmatprep.subr.bf16.mxu0 %v2927
    %3064 = vmatpush1.bf16.msra.mxu0 %v2926
    %3065 = vmatprep.subr.bf16.mxu0 %v2929
    %3066 = vmatpush1.bf16.msra.mxu0 %v2928
    %3067 = vmatprep.subr.bf16.mxu0 %v2931
    %3068 = vmatpush1.bf16.msra.mxu0 %v2930
    %3069 = vmatprep.subr.bf16.mxu0 %v2933
    %3070 = vmatpush1.bf16.msra.mxu0 %v2932
    %3071 = vmatprep.subr.bf16.mxu0 %v2935
    %3072 = vmatpush1.bf16.msra.mxu0 %v2934
    %3073 = vmatprep.subr.bf16.mxu0 %v2937
    %3074 = vmatpush1.bf16.msra.mxu0 %v2936
    %3075 = vmatprep.subr.bf16.mxu0 %v2939
    %3076 = vmatpush1.bf16.msra.mxu0 %v2938
    %3077 = vmatprep.subr.bf16.mxu0 %v2941
    %3078 = vmatpush1.bf16.msra.mxu0 %v2940
    %3079 = vmatprep.subr.bf16.mxu0 %v2943
    %3080 = vmatpush1.bf16.msra.mxu0 %v2942
    %3081 = vmatprep.subr.bf16.mxu0 %v2945
    %3082 = vmatpush1.bf16.msra.mxu0 %v2944
    %3083 = vmatprep.subr.bf16.mxu0 %v2947
    %3084 = vmatpush1.bf16.msra.mxu0 %v2946
    %3085 = vmatprep.mubr.bf16.mxu0 %v2615
    %3086 = vmatmul.mubr.bf16.gmra.mrb[0].mxu0 %v2614
    %v3087 = vpop.f32.mrb[0].mxu0
    %v3088 = vadd.f32 %v3047, %v3087
    %v3089 = vpop.f32.mrb[0].mxu0
    %v3090 = vadd.f32 %v3049, %v3089
    %v3091 = vpop.f32.mrb[0].mxu0
    %v3092 = vpop.f32.mrb[0].mxu0
    %3093 = vdwg.mxu0
    %v3094 = vmax.f32 %v3088, 0.0
    %v3095 = vmax.f32 %v3090, 0.0
    %v3096 = vpack.c.bf16 %v3094, %v3094
    %v3097 = vpack.c.bf16 %v3095, %v3095
    %v3100 = vunpack.c.l.b16 %v3096
    %v3101 = vunpack.c.l.b16 %v3097
    %v3102 = vpack.c.b16 %v3101, %v3100
    %3104 = vst [vmem:[#allocation13] sm:$0xff] %v3102
    %v3105 = vld [vmem:[#allocation11] sm:$0xf]
    %v3106 = vld [vmem:[#allocation11 + $0x4] sm:$0xf]
    %v3107 = vld [vmem:[#allocation11 + $0x8] sm:$0xf]
    %v3108 = vld [vmem:[#allocation11 + $0xc] sm:$0xf]
    %v3109 = vld [vmem:[#allocation11 + $0x10] sm:$0xf]
    %v3110 = vld [vmem:[#allocation11 + $0x14] sm:$0xf]
    %v3111 = vld [vmem:[#allocation11 + $0x18] sm:$0xf]
    %v3112 = vld [vmem:[#allocation11 + $0x1c] sm:$0xf]
    %v3113 = vld [vmem:[#allocation11 + $0x20] sm:$0xf]
    %v3114 = vld [vmem:[#allocation11 + $0x24] sm:$0xf]
    %v3115 = vld [vmem:[#allocation11 + $0x28] sm:$0xf]
    %v3116 = vld [vmem:[#allocation11 + $0x2c] sm:$0xf]
    %v3117 = vld [vmem:[#allocation11 + $0x30] sm:$0xf]
    %v3118 = vld [vmem:[#allocation11 + $0x34] sm:$0xf]
    %v3119 = vld [vmem:[#allocation11 + $0x38] sm:$0xf]
    %v3120 = vld [vmem:[#allocation11 + $0x3c] sm:$0xf]
    %v3121 = vld [vmem:[#allocation11 + $0x40] sm:$0xf]
    %v3122 = vld [vmem:[#allocation11 + $0x44] sm:$0xf]
    %v3123 = vld [vmem:[#allocation11 + $0x48] sm:$0xf]
    %v3124 = vld [vmem:[#allocation11 + $0x4c] sm:$0xf]
    %v3125 = vld [vmem:[#allocation11 + $0x50] sm:$0xf]
    %v3126 = vld [vmem:[#allocation11 + $0x54] sm:$0xf]
    %v3127 = vld [vmem:[#allocation11 + $0x58] sm:$0xf]
    %v3128 = vld [vmem:[#allocation11 + $0x5c] sm:$0xf]
    %v3129 = vld [vmem:[#allocation11 + $0x60] sm:$0xf]
    %v3130 = vld [vmem:[#allocation11 + $0x64] sm:$0xf]
    %v3131 = vld [vmem:[#allocation11 + $0x68] sm:$0xf]
    %v3132 = vld [vmem:[#allocation11 + $0x6c] sm:$0xf]
    %v3133 = vld [vmem:[#allocation11 + $0x70] sm:$0xf]
    %v3134 = vld [vmem:[#allocation11 + $0x74] sm:$0xf]
    %v3135 = vld [vmem:[#allocation11 + $0x78] sm:$0xf]
    %v3136 = vld [vmem:[#allocation11 + $0x7c] sm:$0xf]
    %v3137 = vld [vmem:[%s8] sm:$0x1]
    %v3139 = vlaneseq
    %v3140 = vshrl.u32 %v3139, 7
    %v3141 = vsub.s32 0, %v3140
    %v3142 = vrot.slane %v3137, %v3141
    %v3176 = vunpack.c.l.b16 %v3105
    %v3177 = vunpack.c.l.b16 %v3106
    %v3178 = vunpack.c.l.b16 %v3107
    %v3179 = vunpack.c.l.b16 %v3108
    %v3180 = vunpack.c.l.b16 %v3109
    %v3181 = vunpack.c.l.b16 %v3110
    %v3182 = vunpack.c.l.b16 %v3111
    %v3183 = vunpack.c.l.b16 %v3112
    %v3184 = vunpack.c.l.b16 %v3113
    %v3185 = vunpack.c.l.b16 %v3114
    %v3186 = vunpack.c.l.b16 %v3115
    %v3187 = vunpack.c.l.b16 %v3116
    %v3188 = vunpack.c.l.b16 %v3117
    %v3189 = vunpack.c.l.b16 %v3118
    %v3190 = vunpack.c.l.b16 %v3119
    %v3191 = vunpack.c.l.b16 %v3120
    %v3192 = vunpack.c.l.b16 %v3121
    %v3193 = vunpack.c.l.b16 %v3122
    %v3194 = vunpack.c.l.b16 %v3123
    %v3195 = vunpack.c.l.b16 %v3124
    %v3196 = vunpack.c.l.b16 %v3125
    %v3197 = vunpack.c.l.b16 %v3126
    %v3198 = vunpack.c.l.b16 %v3127
    %v3199 = vunpack.c.l.b16 %v3128
    %v3200 = vunpack.c.l.b16 %v3129
    %v3201 = vunpack.c.l.b16 %v3130
    %v3202 = vunpack.c.l.b16 %v3131
    %v3203 = vunpack.c.l.b16 %v3132
    %v3204 = vunpack.c.l.b16 %v3133
    %v3205 = vunpack.c.l.b16 %v3134
    %v3206 = vunpack.c.l.b16 %v3135
    %v3207 = vunpack.c.l.b16 %v3136
    %v3208 = vpack.c.b16 %v3177, %v3176
    %v3209 = vpack.c.b16 %v3179, %v3178
    %v3210 = vpack.c.b16 %v3181, %v3180
    %v3211 = vpack.c.b16 %v3183, %v3182
    %v3212 = vpack.c.b16 %v3185, %v3184
    %v3213 = vpack.c.b16 %v3187, %v3186
    %v3214 = vpack.c.b16 %v3189, %v3188
    %v3215 = vpack.c.b16 %v3191, %v3190
    %v3216 = vpack.c.b16 %v3193, %v3192
    %v3217 = vpack.c.b16 %v3195, %v3194
    %v3218 = vpack.c.b16 %v3197, %v3196
    %v3219 = vpack.c.b16 %v3199, %v3198
    %v3220 = vpack.c.b16 %v3201, %v3200
    %v3221 = vpack.c.b16 %v3203, %v3202
    %v3222 = vpack.c.b16 %v3205, %v3204
    %v3223 = vpack.c.b16 %v3207, %v3206
    %3240 = vmatprep.subr.bf16.mxu0 0
    %3241 = vmatpush1.bf16.msra.mxu0 %v3208
    %3242 = vmatprep.subr.bf16.mxu0 0
    %3243 = vmatpush1.bf16.msra.mxu0 %v3209
    %3244 = vmatprep.subr.bf16.mxu0 0
    %3245 = vmatpush1.bf16.msra.mxu0 %v3210
    %3246 = vmatprep.subr.bf16.mxu0 0
    %3247 = vmatpush1.bf16.msra.mxu0 %v3211
    %3248 = vmatprep.subr.bf16.mxu0 0
    %3249 = vmatpush1.bf16.msra.mxu0 %v3212
    %3250 = vmatprep.subr.bf16.mxu0 0
    %3251 = vmatpush1.bf16.msra.mxu0 %v3213
    %3252 = vmatprep.subr.bf16.mxu0 0
    %3253 = vmatpush1.bf16.msra.mxu0 %v3214
    %3254 = vmatprep.subr.bf16.mxu0 0
    %3255 = vmatpush1.bf16.msra.mxu0 %v3215
    %3256 = vmatprep.subr.bf16.mxu0 0
    %3257 = vmatpush1.bf16.msra.mxu0 %v3216
    %3258 = vmatprep.subr.bf16.mxu0 0
    %3259 = vmatpush1.bf16.msra.mxu0 %v3217
    %3260 = vmatprep.subr.bf16.mxu0 0
    %3261 = vmatpush1.bf16.msra.mxu0 %v3218
    %3262 = vmatprep.subr.bf16.mxu0 0
    %3263 = vmatpush1.bf16.msra.mxu0 %v3219
    %3264 = vmatprep.subr.bf16.mxu0 0
    %3265 = vmatpush1.bf16.msra.mxu0 %v3220
    %3266 = vmatprep.subr.bf16.mxu0 0
    %3267 = vmatpush1.bf16.msra.mxu0 %v3221
    %3268 = vmatprep.subr.bf16.mxu0 0
    %3269 = vmatpush1.bf16.msra.mxu0 %v3222
    %3270 = vmatprep.subr.bf16.mxu0 0
    %3271 = vmatpush1.bf16.msra.mxu0 %v3223
    %3272 = vmatprep.mubr.bf16.mxu0 %v3097
    %3273 = vmatmul.mubr.bf16.gmra.mrb[0].mxu0 %v3096
    %v3274 = vpop.f32.mrb[0].mxu0
    %v3275 = vadd.f32 %v3142, %v3274
    %v3276 = vpop.f32.mrb[0].mxu0
    %v3277 = vpop.f32.mrb[0].mxu0
    %v3278 = vpop.f32.mrb[0].mxu0
    %3279 = vdwg.mxu0
    %3280 = vst [vmem:[#allocation14] sm:$0xff] %v3275
    // Predicated region
    $region62: #{tpu_custom_call.1} parent=1 // pred_check
      _
    $region63: #{tpu_custom_call.1} parent=1 // pred_check_branch
      %3282 = sbr.rel (0) target = $region65
    $region64: #{tpu_custom_call.1} parent=1 // pred_region
      %s3284 = ssub.s32 128, 128
      %3285 = vsyncadd [#allocation4], %s3284
      %s3287 = sshll.u32 [#allocation13], 4
      %s3288 = int_to_ptr.vmem [resolvable:$true] %s3287
      %3290 = dma.vmem_to_hbm [thread:$0]  %s3288, 128, %s9, [#allocation4]
    $region65: #{tpu_custom_call.1} parent=1 // pred_fallthru
      _
    // Predicated region
    $region66: #{tpu_custom_call.1} parent=1 // pred_check
      _
    $region67: #{tpu_custom_call.1} parent=1 // pred_check_branch
      %3292 = sbr.rel (0) target = $region69
    $region68: #{tpu_custom_call.1} parent=1 // pred_region
      %s3294 = ssub.s32 128, 128
      %3295 = vsyncadd [#allocation15], %s3294
      %s3297 = sshll.u32 [#allocation14], 4
      %s3298 = int_to_ptr.vmem [resolvable:$true] %s3297
      %3300 = dma.vmem_to_hbm [thread:$0]  %s3298, 128, %s10, [#allocation15]
    $region69: #{tpu_custom_call.1} parent=1 // pred_fallthru
      _
    // Predicated region
    $region70: #{tpu_custom_call.1} parent=1 // pred_check
      _
    $region71: #{tpu_custom_call.1} parent=1 // pred_check_branch
      %3302 = sbr.rel (0) target = $region73
    $region72: #{tpu_custom_call.1} parent=1 // pred_region
      %3303 = dma.done [#allocation4], 128
    $region73: #{tpu_custom_call.1} parent=1 // pred_fallthru
      _
    // Predicated region
    $region74: #{tpu_custom_call.1} parent=1 // pred_check
      _
    $region75: #{tpu_custom_call.1} parent=1 // pred_check_branch
      %3305 = sbr.rel (0) target = $region77
    $region76: #{tpu_custom_call.1} parent=1 // pred_region
      %3306 = dma.done [#allocation15], 128
    $region77: #{tpu_custom_call.1} parent=1 // pred_fallthru
      _
    %3307 = vsyncpa [#allocation3], 1
    %3308 = vsyncpa [#allocation6], 1
    %3309 = vsyncpa [#allocation9], 1
    %3310 = vsyncpa [#allocation12], 1
    %3311 = vsyncpa [#allocation4], 1
    %3312 = vsyncpa [#allocation15], 1

</llo_original>
